<compile_context>
chip_gen: v5e
topology: v5e:2x2
jax: 0.10.0
libtpu: 0.0.40
codegen_flags: <defaults>
</compile_context>

<pallas_src>
import numpy as np
import jax
import jax.numpy as jnp
from jax.experimental import pallas as pl
from jax.experimental.pallas import tpu as pltpu

EQUAL_R = 1.0          # cfg.WEIGHT.EQUAL_R (synthetic, deterministic)
WINDOW_SIZE = 11       # pytorch-ssim default
SIGMA = 1.5            # pytorch-ssim default
C1 = 0.01 ** 2
C2 = 0.03 ** 2
_NUM_STATS = 9         # [lf_sq, hf1_abs, hf1_ssim, hf2_abs, hf2_ssim,
                       #  hf3_abs, hf3_ssim, dd_sq, dd_ssim]


def _pad8(h: int) -> int:
    return ((h + 7) // 8) * 8


def _gaussian_band(size: int, window_size: int = WINDOW_SIZE,
                   sigma: float = SIGMA) -> np.ndarray:
    """Band matrix G so that (G @ x) == zero-padded 'same' 1-D Gaussian conv of x
    (exactly F.conv2d(padding=window_size//2) as used by pytorch-ssim)."""
    g = np.exp(-((np.arange(window_size) - window_size // 2) ** 2)
               / (2.0 * sigma ** 2))
    g = (g / g.sum()).astype(np.float32)
    pad = window_size // 2
    m = np.zeros((size, size), np.float32)
    for i in range(size):
        for k in range(size):
            d = k - i + pad
            if 0 <= d < window_size:
                m[i, k] = g[d]
    return m  # symmetric (Gaussian is even)


def _gh_stacked(h: int) -> jnp.ndarray:
    """Block-diagonal of 5 copies of the (H,H) band matrix (slots padded to
    sublane multiples of 8) so one MXU matmul blurs [x; y; x^2; y^2; xy]."""
    hp = _pad8(h)
    gh = _gaussian_band(h)
    m = np.zeros((5 * hp, 5 * hp), np.float32)
    for i in range(5):
        m[i * hp:i * hp + h, i * hp:i * hp + h] = gh
    return jnp.asarray(m)


def _gw_blockdiag(w: int, nc: int) -> jnp.ndarray:
    """Block-diagonal of nc copies of the (W,W) band matrix: blurs each plane's
    W-slice of the lane-dense (H, nc*W) layout with no cross-plane leakage."""
    return jnp.asarray(np.kron(np.eye(nc, dtype=np.float32), _gaussian_band(w)))


def _to_lane_dense(x):
    """(N, C, H, W) -> (H, N*C*W): planes stacked along the 128-wide lane axis."""
    n, c, h, w = x.shape
    return jnp.transpose(x.reshape(n * c, h, w), (1, 0, 2)).reshape(h, n * c * w)


def _diff_sums(x, y):
    d = x - y
    return jnp.sum(jnp.abs(d)), jnp.sum(d * d)


def _ssim_sum(x, y, gh5, gwbd, stack_ref):
    """Sum of the SSIM map for one lane-dense (H, nc*W) pair.

    mu1, mu2, E[x^2], E[y^2], E[xy] come from TWO MXU matmuls over a 5-way
    sublane stack held in VMEM scratch (slot height padded to a multiple of 8)."""
    h = x.shape[0]
    hp = _pad8(h)
    if hp != h:
        # Zero the padded slot rows so they contribute exactly 0 through matmuls.
        stack_ref[...] = jnp.zeros(stack_ref.shape, jnp.float32)
    comps = (x, y, x * x, y * y, x * y)
    for i, comp in enumerate(comps):
        stack_ref[i * hp:i * hp + h, :] = comp
    t = jnp.dot(gh5, stack_ref[...], preferred_element_type=jnp.float32)   # vertical
    b = jnp.dot(t, gwbd, preferred_element_type=jnp.float32)               # horizontal
    mu1 = b[0 * hp:0 * hp + h]
    mu2 = b[1 * hp:1 * hp + h]
    e_xx = b[2 * hp:2 * hp + h]
    e_yy = b[3 * hp:3 * hp + h]
    e_xy = b[4 * hp:4 * hp + h]
    mu1_sq = mu1 * mu1
    mu2_sq = mu2 * mu2
    mu1_mu2 = mu1 * mu2
    sigma1_sq = e_xx - mu1_sq
    sigma2_sq = e_yy - mu2_sq
    sigma12 = e_xy - mu1_mu2
    num = (2.0 * mu1_mu2 + C1) * (2.0 * sigma12 + C2)
    den = (mu1_sq + mu2_sq + C1) * (sigma1_sq + sigma2_sq + C2)
    # EUP reciprocal (free slot); error is far below loss-level precision.
    return jnp.sum(num * pl.reciprocal(den, approx=True))


def _enhance_kernel(lf_x_ref, lf_y_ref,
                    hf1_x_ref, hf1_y_ref,
                    hf2_x_ref, hf2_y_ref,
                    hf3_x_ref, hf3_y_ref,
                    dd_ref, ll_ref,
                    gh1_ref, gw1_ref,
                    gh2_ref, gw2_ref,
                    gh3_ref, gw3_ref,
                    ghd_ref, gwd_ref,
                    out_ref,
                    st1_ref, st2_ref, st3_ref, std_ref):
    f32 = jnp.float32

    # LF pair: only the MSE term is used by the loss.
    _, lf_sq = _diff_sums(lf_x_ref[...].astype(f32), lf_y_ref[...].astype(f32))
    out_ref[0] = lf_sq

    # HF1 pair: L1 + SSIM.
    x = hf1_x_ref[...].astype(f32); y = hf1_y_ref[...].astype(f32)
    a, _ = _diff_sums(x, y)
    out_ref[1] = a
    out_ref[2] = _ssim_sum(x, y, gh1_ref[...], gw1_ref[...], st1_ref)

    # HF2 pair: L1 + SSIM.
    x = hf2_x_ref[...].astype(f32); y = hf2_y_ref[...].astype(f32)
    a, _ = _diff_sums(x, y)
    out_ref[3] = a
    out_ref[4] = _ssim_sum(x, y, gh2_ref[...], gw2_ref[...], st2_ref)

    # HF3 pair: L1 + SSIM.
    x = hf3_x_ref[...].astype(f32); y = hf3_y_ref[...].astype(f32)
    a, _ = _diff_sums(x, y)
    out_ref[5] = a
    out_ref[6] = _ssim_sum(x, y, gh3_ref[...], gw3_ref[...], st3_ref)

    # DD / LL pair: MSE + SSIM.
    x = dd_ref[...].astype(f32); y = ll_ref[...].astype(f32)
    _, sq = _diff_sums(x, y)
    out_ref[7] = sq
    out_ref[8] = _ssim_sum(x, y, ghd_ref[...], gwd_ref[...], std_ref)


@jax.jit
def enhance_loss(pyrs_enh, pyrs_tar, DD, LL):
    """Faithful reimplementation of EnhanceLoss.forward (single fused Pallas call)."""
    LF_enh, HF3_enh, HF2_enh, HF1_enh = pyrs_enh
    HF1_tar, HF2_tar, HF3_tar, LF_tar = pyrs_tar

    # (enh, tar) pairs in kernel order; first (LF) pair is MSE-only.
    pairs = [(LF_enh, LF_tar), (HF1_enh, HF1_tar), (HF2_enh, HF2_tar),
             (HF3_enh, HF3_tar), (DD, LL)]

    tensors, counts = [], []
    for a, b in pairs:
        tensors.append(_to_lane_dense(a))       # dtype cast happens in-kernel
        tensors.append(_to_lane_dense(b))
        counts.append(float(np.prod(a.shape)))

    mats, scratch = [], []
    for a, _ in pairs[1:]:                      # SSIM pairs: HF1, HF2, HF3, DD/LL
        n, c, h, w = a.shape
        mats.append(_gh_stacked(h))
        mats.append(_gw_blockdiag(w, n * c))
        scratch.append(pltpu.VMEM((5 * _pad8(h), n * c * w), jnp.float32))

    inputs = tensors + mats
    in_specs = [pl.BlockSpec(t.shape, lambda i: (0, 0)) for t in inputs]

    sums = pl.pallas_call(
        _enhance_kernel,
        out_shape=jax.ShapeDtypeStruct((_NUM_STATS,), jnp.float32),
        grid_spec=pltpu.PrefetchScalarGridSpec(
            num_scalar_prefetch=0,
            grid=(1,),
            in_specs=in_specs,
            out_specs=pl.BlockSpec((_NUM_STATS,), lambda i: (0,),
                                   memory_space=pltpu.SMEM),
            scratch_shapes=scratch,
        ),
        compiler_params=pltpu.CompilerParams(
            dimension_semantics=("arbitrary",)),
    )(*inputs)

    mse_lf = sums[0] / counts[0]
    l1_1, ssim_1 = sums[1] / counts[1], sums[2] / counts[1]
    l1_2, ssim_2 = sums[3] / counts[2], sums[4] / counts[2]
    l1_3, ssim_3 = sums[5] / counts[3], sums[6] / counts[3]
    mse_dd, ssim_dd = sums[7] / counts[4], sums[8] / counts[4]

    losses_LF = mse_lf
    losses_HFs = l1_1 + (1.0 - ssim_1 + l1_2 + (1.0 - ssim_2)
                         + l1_3 + (1.0 - ssim_3)) * EQUAL_R
    loss = (mse_dd + (1.0 - ssim_dd)) * EQUAL_R
    return (losses_LF + losses_HFs + loss) / 3.0


if __name__ == "__main__":
    key = jax.random.PRNGKey(0)
    keys = jax.random.split(key, 10)
    N, C = 2, 4
    # Laplacian-pyramid-style shapes: HF1 is full res, HF2/HF3/LF downsampled.
    HF1_enh = jax.random.uniform(keys[0], (N, C, 16, 16), jnp.float32)
    HF2_enh = jax.random.uniform(keys[1], (N, C, 8, 8), jnp.float32)
    HF3_enh = jax.random.uniform(keys[2], (N, C, 4, 4), jnp.float32)
    LF_enh = jax.random.uniform(keys[3], (N, C, 4, 4), jnp.float32)
    HF1_tar = jax.random.uniform(keys[4], (N, C, 16, 16), jnp.float32)
    HF2_tar = jax.random.uniform(keys[5], (N, C, 8, 8), jnp.float32)
    HF3_tar = jax.random.uniform(keys[6], (N, C, 4, 4), jnp.float32)
    LF_tar = jax.random.uniform(keys[7], (N, C, 4, 4), jnp.float32)
    DD = jax.random.uniform(keys[8], (N, C, 16, 16), jnp.float32)
    LL = jax.random.uniform(keys[9], (N, C, 16, 16), jnp.float32)

    pyrs_enh = (LF_enh, HF3_enh, HF2_enh, HF1_enh)
    pyrs_tar = (HF1_tar, HF2_tar, HF3_tar, LF_tar)

    out = enhance_loss(pyrs_enh, pyrs_tar, DD, LL)
    out = jax.block_until_ready(out)
    assert out.shape == () and jnp.isfinite(out)
    print("KERNEL_OK")
</pallas_src>

<mosaic_0001>
module attributes {stable_mosaic.version = 11 : i64} {
  func.func @_enhance_kernel(%arg0: i32, %arg1: memref<4x32xf32, #tpu.memory_space<vmem>>, %arg2: memref<4x32xf32, #tpu.memory_space<vmem>>, %arg3: memref<16x128xf32, #tpu.memory_space<vmem>>, %arg4: memref<16x128xf32, #tpu.memory_space<vmem>>, %arg5: memref<8x64xf32, #tpu.memory_space<vmem>>, %arg6: memref<8x64xf32, #tpu.memory_space<vmem>>, %arg7: memref<4x32xf32, #tpu.memory_space<vmem>>, %arg8: memref<4x32xf32, #tpu.memory_space<vmem>>, %arg9: memref<16x128xf32, #tpu.memory_space<vmem>>, %arg10: memref<16x128xf32, #tpu.memory_space<vmem>>, %arg11: memref<80x80xf32, #tpu.memory_space<vmem>>, %arg12: memref<128x128xf32, #tpu.memory_space<vmem>>, %arg13: memref<40x40xf32, #tpu.memory_space<vmem>>, %arg14: memref<64x64xf32, #tpu.memory_space<vmem>>, %arg15: memref<40x40xf32, #tpu.memory_space<vmem>>, %arg16: memref<32x32xf32, #tpu.memory_space<vmem>>, %arg17: memref<80x80xf32, #tpu.memory_space<vmem>>, %arg18: memref<128x128xf32, #tpu.memory_space<vmem>>, %arg19: memref<9xf32, #tpu.memory_space<smem>>, %arg20: memref<80x128xf32, #tpu.memory_space<vmem>>, %arg21: memref<40x64xf32, #tpu.memory_space<vmem>>, %arg22: memref<40x32xf32, #tpu.memory_space<vmem>>, %arg23: memref<80x128xf32, #tpu.memory_space<vmem>>) attributes {dimension_semantics = [#tpu.dimension_semantics<arbitrary>], iteration_bounds = array<i64: 1>, scalar_prefetch = 0 : i64, scratch_operands = 4 : i64, tpu.core_type = #tpu.core_type<tc>, window_params = [{pipeline_mode = #tpu.pipeline_mode<synchronous>, transform_indices = @transform_0, window_bounds = array<i64: 4, 32>}, {pipeline_mode = #tpu.pipeline_mode<synchronous>, transform_indices = @transform_1, window_bounds = array<i64: 4, 32>}, {pipeline_mode = #tpu.pipeline_mode<synchronous>, transform_indices = @transform_2, window_bounds = array<i64: 16, 128>}, {pipeline_mode = #tpu.pipeline_mode<synchronous>, transform_indices = @transform_3, window_bounds = array<i64: 16, 128>}, {pipeline_mode = #tpu.pipeline_mode<synchronous>, transform_indices = @transform_4, window_bounds = array<i64: 8, 64>}, {pipeline_mode = #tpu.pipeline_mode<synchronous>, transform_indices = @transform_5, window_bounds = array<i64: 8, 64>}, {pipeline_mode = #tpu.pipeline_mode<synchronous>, transform_indices = @transform_6, window_bounds = array<i64: 4, 32>}, {pipeline_mode = #tpu.pipeline_mode<synchronous>, transform_indices = @transform_7, window_bounds = array<i64: 4, 32>}, {pipeline_mode = #tpu.pipeline_mode<synchronous>, transform_indices = @transform_8, window_bounds = array<i64: 16, 128>}, {pipeline_mode = #tpu.pipeline_mode<synchronous>, transform_indices = @transform_9, window_bounds = array<i64: 16, 128>}, {pipeline_mode = #tpu.pipeline_mode<synchronous>, transform_indices = @transform_10, window_bounds = array<i64: 80, 80>}, {pipeline_mode = #tpu.pipeline_mode<synchronous>, transform_indices = @transform_11, window_bounds = array<i64: 128, 128>}, {pipeline_mode = #tpu.pipeline_mode<synchronous>, transform_indices = @transform_12, window_bounds = array<i64: 40, 40>}, {pipeline_mode = #tpu.pipeline_mode<synchronous>, transform_indices = @transform_13, window_bounds = array<i64: 64, 64>}, {pipeline_mode = #tpu.pipeline_mode<synchronous>, transform_indices = @transform_14, window_bounds = array<i64: 40, 40>}, {pipeline_mode = #tpu.pipeline_mode<synchronous>, transform_indices = @transform_15, window_bounds = array<i64: 32, 32>}, {pipeline_mode = #tpu.pipeline_mode<synchronous>, transform_indices = @transform_16, window_bounds = array<i64: 80, 80>}, {pipeline_mode = #tpu.pipeline_mode<synchronous>, transform_indices = @transform_17, window_bounds = array<i64: 128, 128>}, {transform_indices = @transform_18, window_bounds = array<i64: 9>}]} {
    %c0 = arith.constant 0 : index
    %c0_0 = arith.constant 0 : index
    %0 = vector.load %arg1[%c0, %c0_0] : memref<4x32xf32, #tpu.memory_space<vmem>>, vector<4x32xf32>
    %c0_1 = arith.constant 0 : index
    %c0_2 = arith.constant 0 : index
    %1 = vector.load %arg2[%c0_1, %c0_2] : memref<4x32xf32, #tpu.memory_space<vmem>>, vector<4x32xf32>
    %2 = arith.subf %0, %1 : vector<4x32xf32>
    %3 = arith.mulf %2, %2 : vector<4x32xf32>
    %4 = vector.shape_cast %3 : vector<4x32xf32> to vector<1x4x32xf32>
    %cst = arith.constant dense<0.000000e+00> : vector<1xf32>
    %5 = vector.multi_reduction <add>, %4, %cst [1, 2] : vector<1x4x32xf32> to vector<1xf32>
    %6 = vector.shape_cast %5 : vector<1xf32> to vector<1x1x1xf32>
    %7 = vector.extract %6[0, 0, 0] : f32 from vector<1x1x1xf32>
    %c0_3 = arith.constant 0 : index
    %8 = memref.load %arg19[%c0_3] : memref<9xf32, #tpu.memory_space<smem>>
    memref.store %7, %arg19[%c0_3] : memref<9xf32, #tpu.memory_space<smem>>
    %c0_4 = arith.constant 0 : index
    %c0_5 = arith.constant 0 : index
    %9 = vector.load %arg3[%c0_4, %c0_5] : memref<16x128xf32, #tpu.memory_space<vmem>>, vector<16x128xf32>
    %c0_6 = arith.constant 0 : index
    %c0_7 = arith.constant 0 : index
    %10 = vector.load %arg4[%c0_6, %c0_7] : memref<16x128xf32, #tpu.memory_space<vmem>>, vector<16x128xf32>
    %11 = arith.subf %9, %10 : vector<16x128xf32>
    %12 = math.absf %11 : vector<16x128xf32>
    %13 = vector.shape_cast %12 : vector<16x128xf32> to vector<1x16x128xf32>
    %cst_8 = arith.constant dense<0.000000e+00> : vector<1xf32>
    %14 = vector.multi_reduction <add>, %13, %cst_8 [1, 2] : vector<1x16x128xf32> to vector<1xf32>
    %15 = vector.shape_cast %14 : vector<1xf32> to vector<1x1x1xf32>
    %16 = vector.extract %15[0, 0, 0] : f32 from vector<1x1x1xf32>
    %c1 = arith.constant 1 : index
    %17 = memref.load %arg19[%c1] : memref<9xf32, #tpu.memory_space<smem>>
    memref.store %16, %arg19[%c1] : memref<9xf32, #tpu.memory_space<smem>>
    %c0_9 = arith.constant 0 : index
    %c0_10 = arith.constant 0 : index
    %18 = vector.load %arg11[%c0_9, %c0_10] : memref<80x80xf32, #tpu.memory_space<vmem>>, vector<80x80xf32>
    %c0_11 = arith.constant 0 : index
    %c0_12 = arith.constant 0 : index
    %19 = vector.load %arg12[%c0_11, %c0_12] : memref<128x128xf32, #tpu.memory_space<vmem>>, vector<128x128xf32>
    %20 = arith.mulf %9, %9 : vector<16x128xf32>
    %21 = arith.mulf %10, %10 : vector<16x128xf32>
    %22 = arith.mulf %9, %10 : vector<16x128xf32>
    %c0_13 = arith.constant 0 : index
    %c0_14 = arith.constant 0 : index
    %23 = vector.load %arg20[%c0_13, %c0_14] : memref<80x128xf32, #tpu.memory_space<vmem>>, vector<16x128xf32>
    tpu.vector_store %arg20[%c0_13, %c0_14], %9 {strides = array<i32>} : memref<80x128xf32, #tpu.memory_space<vmem>>, vector<16x128xf32>,
    %c16 = arith.constant 16 : index
    %c0_15 = arith.constant 0 : index
    %24 = vector.load %arg20[%c16, %c0_15] : memref<80x128xf32, #tpu.memory_space<vmem>>, vector<16x128xf32>
    tpu.vector_store %arg20[%c16, %c0_15], %10 {strides = array<i32>} : memref<80x128xf32, #tpu.memory_space<vmem>>, vector<16x128xf32>,
    %c32 = arith.constant 32 : index
    %c0_16 = arith.constant 0 : index
    %25 = vector.load %arg20[%c32, %c0_16] : memref<80x128xf32, #tpu.memory_space<vmem>>, vector<16x128xf32>
    tpu.vector_store %arg20[%c32, %c0_16], %20 {strides = array<i32>} : memref<80x128xf32, #tpu.memory_space<vmem>>, vector<16x128xf32>,
    %c48 = arith.constant 48 : index
    %c0_17 = arith.constant 0 : index
    %26 = vector.load %arg20[%c48, %c0_17] : memref<80x128xf32, #tpu.memory_space<vmem>>, vector<16x128xf32>
    tpu.vector_store %arg20[%c48, %c0_17], %21 {strides = array<i32>} : memref<80x128xf32, #tpu.memory_space<vmem>>, vector<16x128xf32>,
    %c64 = arith.constant 64 : index
    %c0_18 = arith.constant 0 : index
    %27 = vector.load %arg20[%c64, %c0_18] : memref<80x128xf32, #tpu.memory_space<vmem>>, vector<16x128xf32>
    tpu.vector_store %arg20[%c64, %c0_18], %22 {strides = array<i32>} : memref<80x128xf32, #tpu.memory_space<vmem>>, vector<16x128xf32>,
    %c0_19 = arith.constant 0 : index
    %c0_20 = arith.constant 0 : index
    %28 = vector.load %arg20[%c0_19, %c0_20] : memref<80x128xf32, #tpu.memory_space<vmem>>, vector<80x128xf32>
    %cst_21 = arith.constant dense<0.000000e+00> : vector<80x128xf32>
    %29 = tpu.matmul %18, %28, %cst_21 {dimension_numbers = #tpu.dot_dimension_numbers<[1], [0], [0], [1], [0, 0, 1, 1], [], []>} : vector<80x80xf32>, vector<80x128xf32>, vector<80x128xf32> -> vector<80x128xf32>
    %cst_22 = arith.constant dense<0.000000e+00> : vector<80x128xf32>
    %30 = tpu.matmul %29, %19, %cst_22 {dimension_numbers = #tpu.dot_dimension_numbers<[1], [0], [0], [1], [0, 0, 1, 1], [], []>} : vector<80x128xf32>, vector<128x128xf32>, vector<80x128xf32> -> vector<80x128xf32>
    %31 = vector.extract_strided_slice %30 {offsets = [0, 0], sizes = [16, 128], strides = [1, 1]} : vector<80x128xf32> to vector<16x128xf32>
    %32 = vector.extract_strided_slice %30 {offsets = [16, 0], sizes = [16, 128], strides = [1, 1]} : vector<80x128xf32> to vector<16x128xf32>
    %33 = vector.extract_strided_slice %30 {offsets = [32, 0], sizes = [16, 128], strides = [1, 1]} : vector<80x128xf32> to vector<16x128xf32>
    %34 = vector.extract_strided_slice %30 {offsets = [48, 0], sizes = [16, 128], strides = [1, 1]} : vector<80x128xf32> to vector<16x128xf32>
    %35 = vector.extract_strided_slice %30 {offsets = [64, 0], sizes = [16, 128], strides = [1, 1]} : vector<80x128xf32> to vector<16x128xf32>
    %36 = arith.mulf %31, %31 : vector<16x128xf32>
    %37 = arith.mulf %32, %32 : vector<16x128xf32>
    %38 = arith.mulf %31, %32 : vector<16x128xf32>
    %39 = arith.subf %33, %36 : vector<16x128xf32>
    %40 = arith.subf %34, %37 : vector<16x128xf32>
    %41 = arith.subf %35, %38 : vector<16x128xf32>
    %cst_23 = arith.constant 2.000000e+00 : f32
    %42 = vector.broadcast %cst_23 : f32 to vector<16x128xf32>
    %43 = arith.mulf %42, %38 : vector<16x128xf32>
    %cst_24 = arith.constant 9.99999974E-5 : f32
    %44 = vector.broadcast %cst_24 : f32 to vector<16x128xf32>
    %45 = arith.addf %43, %44 : vector<16x128xf32>
    %cst_25 = arith.constant 2.000000e+00 : f32
    %46 = vector.broadcast %cst_25 : f32 to vector<16x128xf32>
    %47 = arith.mulf %46, %41 : vector<16x128xf32>
    %cst_26 = arith.constant 8.99999984E-4 : f32
    %48 = vector.broadcast %cst_26 : f32 to vector<16x128xf32>
    %49 = arith.addf %47, %48 : vector<16x128xf32>
    %50 = arith.mulf %45, %49 : vector<16x128xf32>
    %51 = arith.addf %36, %37 : vector<16x128xf32>
    %cst_27 = arith.constant 9.99999974E-5 : f32
    %52 = vector.broadcast %cst_27 : f32 to vector<16x128xf32>
    %53 = arith.addf %51, %52 : vector<16x128xf32>
    %54 = arith.addf %39, %40 : vector<16x128xf32>
    %cst_28 = arith.constant 8.99999984E-4 : f32
    %55 = vector.broadcast %cst_28 : f32 to vector<16x128xf32>
    %56 = arith.addf %54, %55 : vector<16x128xf32>
    %57 = arith.mulf %53, %56 : vector<16x128xf32>
    %58 = tpu.reciprocal %57 {approx = true} : vector<16x128xf32> -> vector<16x128xf32>
    %59 = arith.mulf %50, %58 : vector<16x128xf32>
    %60 = vector.shape_cast %59 : vector<16x128xf32> to vector<1x16x128xf32>
    %cst_29 = arith.constant dense<0.000000e+00> : vector<1xf32>
    %61 = vector.multi_reduction <add>, %60, %cst_29 [1, 2] : vector<1x16x128xf32> to vector<1xf32>
    %62 = vector.shape_cast %61 : vector<1xf32> to vector<1x1x1xf32>
    %63 = vector.extract %62[0, 0, 0] : f32 from vector<1x1x1xf32>
    %c2 = arith.constant 2 : index
    %64 = memref.load %arg19[%c2] : memref<9xf32, #tpu.memory_space<smem>>
    memref.store %63, %arg19[%c2] : memref<9xf32, #tpu.memory_space<smem>>
    %c0_30 = arith.constant 0 : index
    %c0_31 = arith.constant 0 : index
    %65 = vector.load %arg5[%c0_30, %c0_31] : memref<8x64xf32, #tpu.memory_space<vmem>>, vector<8x64xf32>
    %c0_32 = arith.constant 0 : index
    %c0_33 = arith.constant 0 : index
    %66 = vector.load %arg6[%c0_32, %c0_33] : memref<8x64xf32, #tpu.memory_space<vmem>>, vector<8x64xf32>
    %67 = arith.subf %65, %66 : vector<8x64xf32>
    %68 = math.absf %67 : vector<8x64xf32>
    %69 = vector.shape_cast %68 : vector<8x64xf32> to vector<1x8x64xf32>
    %cst_34 = arith.constant dense<0.000000e+00> : vector<1xf32>
    %70 = vector.multi_reduction <add>, %69, %cst_34 [1, 2] : vector<1x8x64xf32> to vector<1xf32>
    %71 = vector.shape_cast %70 : vector<1xf32> to vector<1x1x1xf32>
    %72 = vector.extract %71[0, 0, 0] : f32 from vector<1x1x1xf32>
    %c3 = arith.constant 3 : index
    %73 = memref.load %arg19[%c3] : memref<9xf32, #tpu.memory_space<smem>>
    memref.store %72, %arg19[%c3] : memref<9xf32, #tpu.memory_space<smem>>
    %c0_35 = arith.constant 0 : index
    %c0_36 = arith.constant 0 : index
    %74 = vector.load %arg13[%c0_35, %c0_36] : memref<40x40xf32, #tpu.memory_space<vmem>>, vector<40x40xf32>
    %c0_37 = arith.constant 0 : index
    %c0_38 = arith.constant 0 : index
    %75 = vector.load %arg14[%c0_37, %c0_38] : memref<64x64xf32, #tpu.memory_space<vmem>>, vector<64x64xf32>
    %76 = arith.mulf %65, %65 : vector<8x64xf32>
    %77 = arith.mulf %66, %66 : vector<8x64xf32>
    %78 = arith.mulf %65, %66 : vector<8x64xf32>
    %c0_39 = arith.constant 0 : index
    %c0_40 = arith.constant 0 : index
    %79 = vector.load %arg21[%c0_39, %c0_40] : memref<40x64xf32, #tpu.memory_space<vmem>>, vector<8x64xf32>
    tpu.vector_store %arg21[%c0_39, %c0_40], %65 {strides = array<i32>} : memref<40x64xf32, #tpu.memory_space<vmem>>, vector<8x64xf32>,
    %c8 = arith.constant 8 : index
    %c0_41 = arith.constant 0 : index
    %80 = vector.load %arg21[%c8, %c0_41] : memref<40x64xf32, #tpu.memory_space<vmem>>, vector<8x64xf32>
    tpu.vector_store %arg21[%c8, %c0_41], %66 {strides = array<i32>} : memref<40x64xf32, #tpu.memory_space<vmem>>, vector<8x64xf32>,
    %c16_42 = arith.constant 16 : index
    %c0_43 = arith.constant 0 : index
    %81 = vector.load %arg21[%c16_42, %c0_43] : memref<40x64xf32, #tpu.memory_space<vmem>>, vector<8x64xf32>
    tpu.vector_store %arg21[%c16_42, %c0_43], %76 {strides = array<i32>} : memref<40x64xf32, #tpu.memory_space<vmem>>, vector<8x64xf32>,
    %c24 = arith.constant 24 : index
    %c0_44 = arith.constant 0 : index
    %82 = vector.load %arg21[%c24, %c0_44] : memref<40x64xf32, #tpu.memory_space<vmem>>, vector<8x64xf32>
    tpu.vector_store %arg21[%c24, %c0_44], %77 {strides = array<i32>} : memref<40x64xf32, #tpu.memory_space<vmem>>, vector<8x64xf32>,
    %c32_45 = arith.constant 32 : index
    %c0_46 = arith.constant 0 : index
    %83 = vector.load %arg21[%c32_45, %c0_46] : memref<40x64xf32, #tpu.memory_space<vmem>>, vector<8x64xf32>
    tpu.vector_store %arg21[%c32_45, %c0_46], %78 {strides = array<i32>} : memref<40x64xf32, #tpu.memory_space<vmem>>, vector<8x64xf32>,
    %c0_47 = arith.constant 0 : index
    %c0_48 = arith.constant 0 : index
    %84 = vector.load %arg21[%c0_47, %c0_48] : memref<40x64xf32, #tpu.memory_space<vmem>>, vector<40x64xf32>
    %cst_49 = arith.constant dense<0.000000e+00> : vector<40x64xf32>
    %85 = tpu.matmul %74, %84, %cst_49 {dimension_numbers = #tpu.dot_dimension_numbers<[1], [0], [0], [1], [0, 0, 1, 1], [], []>} : vector<40x40xf32>, vector<40x64xf32>, vector<40x64xf32> -> vector<40x64xf32>
    %cst_50 = arith.constant dense<0.000000e+00> : vector<40x64xf32>
    %86 = tpu.matmul %85, %75, %cst_50 {dimension_numbers = #tpu.dot_dimension_numbers<[1], [0], [0], [1], [0, 0, 1, 1], [], []>} : vector<40x64xf32>, vector<64x64xf32>, vector<40x64xf32> -> vector<40x64xf32>
    %87 = vector.extract_strided_slice %86 {offsets = [0, 0], sizes = [8, 64], strides = [1, 1]} : vector<40x64xf32> to vector<8x64xf32>
    %88 = vector.extract_strided_slice %86 {offsets = [8, 0], sizes = [8, 64], strides = [1, 1]} : vector<40x64xf32> to vector<8x64xf32>
    %89 = vector.extract_strided_slice %86 {offsets = [16, 0], sizes = [8, 64], strides = [1, 1]} : vector<40x64xf32> to vector<8x64xf32>
    %90 = vector.extract_strided_slice %86 {offsets = [24, 0], sizes = [8, 64], strides = [1, 1]} : vector<40x64xf32> to vector<8x64xf32>
    %91 = vector.extract_strided_slice %86 {offsets = [32, 0], sizes = [8, 64], strides = [1, 1]} : vector<40x64xf32> to vector<8x64xf32>
    %92 = arith.mulf %87, %87 : vector<8x64xf32>
    %93 = arith.mulf %88, %88 : vector<8x64xf32>
    %94 = arith.mulf %87, %88 : vector<8x64xf32>
    %95 = arith.subf %89, %92 : vector<8x64xf32>
    %96 = arith.subf %90, %93 : vector<8x64xf32>
    %97 = arith.subf %91, %94 : vector<8x64xf32>
    %cst_51 = arith.constant 2.000000e+00 : f32
    %98 = vector.broadcast %cst_51 : f32 to vector<8x64xf32>
    %99 = arith.mulf %98, %94 : vector<8x64xf32>
    %cst_52 = arith.constant 9.99999974E-5 : f32
    %100 = vector.broadcast %cst_52 : f32 to vector<8x64xf32>
    %101 = arith.addf %99, %100 : vector<8x64xf32>
    %cst_53 = arith.constant 2.000000e+00 : f32
    %102 = vector.broadcast %cst_53 : f32 to vector<8x64xf32>
    %103 = arith.mulf %102, %97 : vector<8x64xf32>
    %cst_54 = arith.constant 8.99999984E-4 : f32
    %104 = vector.broadcast %cst_54 : f32 to vector<8x64xf32>
    %105 = arith.addf %103, %104 : vector<8x64xf32>
    %106 = arith.mulf %101, %105 : vector<8x64xf32>
    %107 = arith.addf %92, %93 : vector<8x64xf32>
    %cst_55 = arith.constant 9.99999974E-5 : f32
    %108 = vector.broadcast %cst_55 : f32 to vector<8x64xf32>
    %109 = arith.addf %107, %108 : vector<8x64xf32>
    %110 = arith.addf %95, %96 : vector<8x64xf32>
    %cst_56 = arith.constant 8.99999984E-4 : f32
    %111 = vector.broadcast %cst_56 : f32 to vector<8x64xf32>
    %112 = arith.addf %110, %111 : vector<8x64xf32>
    %113 = arith.mulf %109, %112 : vector<8x64xf32>
    %114 = tpu.reciprocal %113 {approx = true} : vector<8x64xf32> -> vector<8x64xf32>
    %115 = arith.mulf %106, %114 : vector<8x64xf32>
    %116 = vector.shape_cast %115 : vector<8x64xf32> to vector<1x8x64xf32>
    %cst_57 = arith.constant dense<0.000000e+00> : vector<1xf32>
    %117 = vector.multi_reduction <add>, %116, %cst_57 [1, 2] : vector<1x8x64xf32> to vector<1xf32>
    %118 = vector.shape_cast %117 : vector<1xf32> to vector<1x1x1xf32>
    %119 = vector.extract %118[0, 0, 0] : f32 from vector<1x1x1xf32>
    %c4 = arith.constant 4 : index
    %120 = memref.load %arg19[%c4] : memref<9xf32, #tpu.memory_space<smem>>
    memref.store %119, %arg19[%c4] : memref<9xf32, #tpu.memory_space<smem>>
    %c0_58 = arith.constant 0 : index
    %c0_59 = arith.constant 0 : index
    %121 = vector.load %arg7[%c0_58, %c0_59] : memref<4x32xf32, #tpu.memory_space<vmem>>, vector<4x32xf32>
    %c0_60 = arith.constant 0 : index
    %c0_61 = arith.constant 0 : index
    %122 = vector.load %arg8[%c0_60, %c0_61] : memref<4x32xf32, #tpu.memory_space<vmem>>, vector<4x32xf32>
    %123 = arith.subf %121, %122 : vector<4x32xf32>
    %124 = math.absf %123 : vector<4x32xf32>
    %125 = vector.shape_cast %124 : vector<4x32xf32> to vector<1x4x32xf32>
    %cst_62 = arith.constant dense<0.000000e+00> : vector<1xf32>
    %126 = vector.multi_reduction <add>, %125, %cst_62 [1, 2] : vector<1x4x32xf32> to vector<1xf32>
    %127 = vector.shape_cast %126 : vector<1xf32> to vector<1x1x1xf32>
    %128 = vector.extract %127[0, 0, 0] : f32 from vector<1x1x1xf32>
    %c5 = arith.constant 5 : index
    %129 = memref.load %arg19[%c5] : memref<9xf32, #tpu.memory_space<smem>>
    memref.store %128, %arg19[%c5] : memref<9xf32, #tpu.memory_space<smem>>
    %c0_63 = arith.constant 0 : index
    %c0_64 = arith.constant 0 : index
    %130 = vector.load %arg15[%c0_63, %c0_64] : memref<40x40xf32, #tpu.memory_space<vmem>>, vector<40x40xf32>
    %c0_65 = arith.constant 0 : index
    %c0_66 = arith.constant 0 : index
    %131 = vector.load %arg16[%c0_65, %c0_66] : memref<32x32xf32, #tpu.memory_space<vmem>>, vector<32x32xf32>
    %cst_67 = arith.constant 0.000000e+00 : f32
    %132 = vector.broadcast %cst_67 : f32 to vector<40x32xf32>
    %c0_68 = arith.constant 0 : index
    %c0_69 = arith.constant 0 : index
    %133 = vector.load %arg22[%c0_68, %c0_69] : memref<40x32xf32, #tpu.memory_space<vmem>>, vector<40x32xf32>
    tpu.vector_store %arg22[%c0_68, %c0_69], %132 {strides = array<i32>} : memref<40x32xf32, #tpu.memory_space<vmem>>, vector<40x32xf32>,
    %134 = arith.mulf %121, %121 : vector<4x32xf32>
    %135 = arith.mulf %122, %122 : vector<4x32xf32>
    %136 = arith.mulf %121, %122 : vector<4x32xf32>
    %c0_70 = arith.constant 0 : index
    %c0_71 = arith.constant 0 : index
    %137 = vector.load %arg22[%c0_70, %c0_71] : memref<40x32xf32, #tpu.memory_space<vmem>>, vector<4x32xf32>
    tpu.vector_store %arg22[%c0_70, %c0_71], %121 {strides = array<i32>} : memref<40x32xf32, #tpu.memory_space<vmem>>, vector<4x32xf32>,
    %c8_72 = arith.constant 8 : index
    %c0_73 = arith.constant 0 : index
    %138 = vector.load %arg22[%c8_72, %c0_73] : memref<40x32xf32, #tpu.memory_space<vmem>>, vector<4x32xf32>
    tpu.vector_store %arg22[%c8_72, %c0_73], %122 {strides = array<i32>} : memref<40x32xf32, #tpu.memory_space<vmem>>, vector<4x32xf32>,
    %c16_74 = arith.constant 16 : index
    %c0_75 = arith.constant 0 : index
    %139 = vector.load %arg22[%c16_74, %c0_75] : memref<40x32xf32, #tpu.memory_space<vmem>>, vector<4x32xf32>
    tpu.vector_store %arg22[%c16_74, %c0_75], %134 {strides = array<i32>} : memref<40x32xf32, #tpu.memory_space<vmem>>, vector<4x32xf32>,
    %c24_76 = arith.constant 24 : index
    %c0_77 = arith.constant 0 : index
    %140 = vector.load %arg22[%c24_76, %c0_77] : memref<40x32xf32, #tpu.memory_space<vmem>>, vector<4x32xf32>
    tpu.vector_store %arg22[%c24_76, %c0_77], %135 {strides = array<i32>} : memref<40x32xf32, #tpu.memory_space<vmem>>, vector<4x32xf32>,
    %c32_78 = arith.constant 32 : index
    %c0_79 = arith.constant 0 : index
    %141 = vector.load %arg22[%c32_78, %c0_79] : memref<40x32xf32, #tpu.memory_space<vmem>>, vector<4x32xf32>
    tpu.vector_store %arg22[%c32_78, %c0_79], %136 {strides = array<i32>} : memref<40x32xf32, #tpu.memory_space<vmem>>, vector<4x32xf32>,
    %c0_80 = arith.constant 0 : index
    %c0_81 = arith.constant 0 : index
    %142 = vector.load %arg22[%c0_80, %c0_81] : memref<40x32xf32, #tpu.memory_space<vmem>>, vector<40x32xf32>
    %cst_82 = arith.constant dense<0.000000e+00> : vector<40x32xf32>
    %143 = tpu.matmul %130, %142, %cst_82 {dimension_numbers = #tpu.dot_dimension_numbers<[1], [0], [0], [1], [0, 0, 1, 1], [], []>} : vector<40x40xf32>, vector<40x32xf32>, vector<40x32xf32> -> vector<40x32xf32>
    %cst_83 = arith.constant dense<0.000000e+00> : vector<40x32xf32>
    %144 = tpu.matmul %143, %131, %cst_83 {dimension_numbers = #tpu.dot_dimension_numbers<[1], [0], [0], [1], [0, 0, 1, 1], [], []>} : vector<40x32xf32>, vector<32x32xf32>, vector<40x32xf32> -> vector<40x32xf32>
    %145 = vector.extract_strided_slice %144 {offsets = [0, 0], sizes = [4, 32], strides = [1, 1]} : vector<40x32xf32> to vector<4x32xf32>
    %146 = vector.extract_strided_slice %144 {offsets = [8, 0], sizes = [4, 32], strides = [1, 1]} : vector<40x32xf32> to vector<4x32xf32>
    %147 = vector.extract_strided_slice %144 {offsets = [16, 0], sizes = [4, 32], strides = [1, 1]} : vector<40x32xf32> to vector<4x32xf32>
    %148 = vector.extract_strided_slice %144 {offsets = [24, 0], sizes = [4, 32], strides = [1, 1]} : vector<40x32xf32> to vector<4x32xf32>
    %149 = vector.extract_strided_slice %144 {offsets = [32, 0], sizes = [4, 32], strides = [1, 1]} : vector<40x32xf32> to vector<4x32xf32>
    %150 = arith.mulf %145, %145 : vector<4x32xf32>
    %151 = arith.mulf %146, %146 : vector<4x32xf32>
    %152 = arith.mulf %145, %146 : vector<4x32xf32>
    %153 = arith.subf %147, %150 : vector<4x32xf32>
    %154 = arith.subf %148, %151 : vector<4x32xf32>
    %155 = arith.subf %149, %152 : vector<4x32xf32>
    %cst_84 = arith.constant 2.000000e+00 : f32
    %156 = vector.broadcast %cst_84 : f32 to vector<4x32xf32>
    %157 = arith.mulf %156, %152 : vector<4x32xf32>
    %cst_85 = arith.constant 9.99999974E-5 : f32
    %158 = vector.broadcast %cst_85 : f32 to vector<4x32xf32>
    %159 = arith.addf %157, %158 : vector<4x32xf32>
    %cst_86 = arith.constant 2.000000e+00 : f32
    %160 = vector.broadcast %cst_86 : f32 to vector<4x32xf32>
    %161 = arith.mulf %160, %155 : vector<4x32xf32>
    %cst_87 = arith.constant 8.99999984E-4 : f32
    %162 = vector.broadcast %cst_87 : f32 to vector<4x32xf32>
    %163 = arith.addf %161, %162 : vector<4x32xf32>
    %164 = arith.mulf %159, %163 : vector<4x32xf32>
    %165 = arith.addf %150, %151 : vector<4x32xf32>
    %cst_88 = arith.constant 9.99999974E-5 : f32
    %166 = vector.broadcast %cst_88 : f32 to vector<4x32xf32>
    %167 = arith.addf %165, %166 : vector<4x32xf32>
    %168 = arith.addf %153, %154 : vector<4x32xf32>
    %cst_89 = arith.constant 8.99999984E-4 : f32
    %169 = vector.broadcast %cst_89 : f32 to vector<4x32xf32>
    %170 = arith.addf %168, %169 : vector<4x32xf32>
    %171 = arith.mulf %167, %170 : vector<4x32xf32>
    %172 = tpu.reciprocal %171 {approx = true} : vector<4x32xf32> -> vector<4x32xf32>
    %173 = arith.mulf %164, %172 : vector<4x32xf32>
    %174 = vector.shape_cast %173 : vector<4x32xf32> to vector<1x4x32xf32>
    %cst_90 = arith.constant dense<0.000000e+00> : vector<1xf32>
    %175 = vector.multi_reduction <add>, %174, %cst_90 [1, 2] : vector<1x4x32xf32> to vector<1xf32>
    %176 = vector.shape_cast %175 : vector<1xf32> to vector<1x1x1xf32>
    %177 = vector.extract %176[0, 0, 0] : f32 from vector<1x1x1xf32>
    %c6 = arith.constant 6 : index
    %178 = memref.load %arg19[%c6] : memref<9xf32, #tpu.memory_space<smem>>
    memref.store %177, %arg19[%c6] : memref<9xf32, #tpu.memory_space<smem>>
    %c0_91 = arith.constant 0 : index
    %c0_92 = arith.constant 0 : index
    %179 = vector.load %arg9[%c0_91, %c0_92] : memref<16x128xf32, #tpu.memory_space<vmem>>, vector<16x128xf32>
    %c0_93 = arith.constant 0 : index
    %c0_94 = arith.constant 0 : index
    %180 = vector.load %arg10[%c0_93, %c0_94] : memref<16x128xf32, #tpu.memory_space<vmem>>, vector<16x128xf32>
    %181 = arith.subf %179, %180 : vector<16x128xf32>
    %182 = arith.mulf %181, %181 : vector<16x128xf32>
    %183 = vector.shape_cast %182 : vector<16x128xf32> to vector<1x16x128xf32>
    %cst_95 = arith.constant dense<0.000000e+00> : vector<1xf32>
    %184 = vector.multi_reduction <add>, %183, %cst_95 [1, 2] : vector<1x16x128xf32> to vector<1xf32>
    %185 = vector.shape_cast %184 : vector<1xf32> to vector<1x1x1xf32>
    %186 = vector.extract %185[0, 0, 0] : f32 from vector<1x1x1xf32>
    %c7 = arith.constant 7 : index
    %187 = memref.load %arg19[%c7] : memref<9xf32, #tpu.memory_space<smem>>
    memref.store %186, %arg19[%c7] : memref<9xf32, #tpu.memory_space<smem>>
    %c0_96 = arith.constant 0 : index
    %c0_97 = arith.constant 0 : index
    %188 = vector.load %arg17[%c0_96, %c0_97] : memref<80x80xf32, #tpu.memory_space<vmem>>, vector<80x80xf32>
    %c0_98 = arith.constant 0 : index
    %c0_99 = arith.constant 0 : index
    %189 = vector.load %arg18[%c0_98, %c0_99] : memref<128x128xf32, #tpu.memory_space<vmem>>, vector<128x128xf32>
    %190 = arith.mulf %179, %179 : vector<16x128xf32>
    %191 = arith.mulf %180, %180 : vector<16x128xf32>
    %192 = arith.mulf %179, %180 : vector<16x128xf32>
    %c0_100 = arith.constant 0 : index
    %c0_101 = arith.constant 0 : index
    %193 = vector.load %arg23[%c0_100, %c0_101] : memref<80x128xf32, #tpu.memory_space<vmem>>, vector<16x128xf32>
    tpu.vector_store %arg23[%c0_100, %c0_101], %179 {strides = array<i32>} : memref<80x128xf32, #tpu.memory_space<vmem>>, vector<16x128xf32>,
    %c16_102 = arith.constant 16 : index
    %c0_103 = arith.constant 0 : index
    %194 = vector.load %arg23[%c16_102, %c0_103] : memref<80x128xf32, #tpu.memory_space<vmem>>, vector<16x128xf32>
    tpu.vector_store %arg23[%c16_102, %c0_103], %180 {strides = array<i32>} : memref<80x128xf32, #tpu.memory_space<vmem>>, vector<16x128xf32>,
    %c32_104 = arith.constant 32 : index
    %c0_105 = arith.constant 0 : index
    %195 = vector.load %arg23[%c32_104, %c0_105] : memref<80x128xf32, #tpu.memory_space<vmem>>, vector<16x128xf32>
    tpu.vector_store %arg23[%c32_104, %c0_105], %190 {strides = array<i32>} : memref<80x128xf32, #tpu.memory_space<vmem>>, vector<16x128xf32>,
    %c48_106 = arith.constant 48 : index
    %c0_107 = arith.constant 0 : index
    %196 = vector.load %arg23[%c48_106, %c0_107] : memref<80x128xf32, #tpu.memory_space<vmem>>, vector<16x128xf32>
    tpu.vector_store %arg23[%c48_106, %c0_107], %191 {strides = array<i32>} : memref<80x128xf32, #tpu.memory_space<vmem>>, vector<16x128xf32>,
    %c64_108 = arith.constant 64 : index
    %c0_109 = arith.constant 0 : index
    %197 = vector.load %arg23[%c64_108, %c0_109] : memref<80x128xf32, #tpu.memory_space<vmem>>, vector<16x128xf32>
    tpu.vector_store %arg23[%c64_108, %c0_109], %192 {strides = array<i32>} : memref<80x128xf32, #tpu.memory_space<vmem>>, vector<16x128xf32>,
    %c0_110 = arith.constant 0 : index
    %c0_111 = arith.constant 0 : index
    %198 = vector.load %arg23[%c0_110, %c0_111] : memref<80x128xf32, #tpu.memory_space<vmem>>, vector<80x128xf32>
    %cst_112 = arith.constant dense<0.000000e+00> : vector<80x128xf32>
    %199 = tpu.matmul %188, %198, %cst_112 {dimension_numbers = #tpu.dot_dimension_numbers<[1], [0], [0], [1], [0, 0, 1, 1], [], []>} : vector<80x80xf32>, vector<80x128xf32>, vector<80x128xf32> -> vector<80x128xf32>
    %cst_113 = arith.constant dense<0.000000e+00> : vector<80x128xf32>
    %200 = tpu.matmul %199, %189, %cst_113 {dimension_numbers = #tpu.dot_dimension_numbers<[1], [0], [0], [1], [0, 0, 1, 1], [], []>} : vector<80x128xf32>, vector<128x128xf32>, vector<80x128xf32> -> vector<80x128xf32>
    %201 = vector.extract_strided_slice %200 {offsets = [0, 0], sizes = [16, 128], strides = [1, 1]} : vector<80x128xf32> to vector<16x128xf32>
    %202 = vector.extract_strided_slice %200 {offsets = [16, 0], sizes = [16, 128], strides = [1, 1]} : vector<80x128xf32> to vector<16x128xf32>
    %203 = vector.extract_strided_slice %200 {offsets = [32, 0], sizes = [16, 128], strides = [1, 1]} : vector<80x128xf32> to vector<16x128xf32>
    %204 = vector.extract_strided_slice %200 {offsets = [48, 0], sizes = [16, 128], strides = [1, 1]} : vector<80x128xf32> to vector<16x128xf32>
    %205 = vector.extract_strided_slice %200 {offsets = [64, 0], sizes = [16, 128], strides = [1, 1]} : vector<80x128xf32> to vector<16x128xf32>
    %206 = arith.mulf %201, %201 : vector<16x128xf32>
    %207 = arith.mulf %202, %202 : vector<16x128xf32>
    %208 = arith.mulf %201, %202 : vector<16x128xf32>
    %209 = arith.subf %203, %206 : vector<16x128xf32>
    %210 = arith.subf %204, %207 : vector<16x128xf32>
    %211 = arith.subf %205, %208 : vector<16x128xf32>
    %cst_114 = arith.constant 2.000000e+00 : f32
    %212 = vector.broadcast %cst_114 : f32 to vector<16x128xf32>
    %213 = arith.mulf %212, %208 : vector<16x128xf32>
    %cst_115 = arith.constant 9.99999974E-5 : f32
    %214 = vector.broadcast %cst_115 : f32 to vector<16x128xf32>
    %215 = arith.addf %213, %214 : vector<16x128xf32>
    %cst_116 = arith.constant 2.000000e+00 : f32
    %216 = vector.broadcast %cst_116 : f32 to vector<16x128xf32>
    %217 = arith.mulf %216, %211 : vector<16x128xf32>
    %cst_117 = arith.constant 8.99999984E-4 : f32
    %218 = vector.broadcast %cst_117 : f32 to vector<16x128xf32>
    %219 = arith.addf %217, %218 : vector<16x128xf32>
    %220 = arith.mulf %215, %219 : vector<16x128xf32>
    %221 = arith.addf %206, %207 : vector<16x128xf32>
    %cst_118 = arith.constant 9.99999974E-5 : f32
    %222 = vector.broadcast %cst_118 : f32 to vector<16x128xf32>
    %223 = arith.addf %221, %222 : vector<16x128xf32>
    %224 = arith.addf %209, %210 : vector<16x128xf32>
    %cst_119 = arith.constant 8.99999984E-4 : f32
    %225 = vector.broadcast %cst_119 : f32 to vector<16x128xf32>
    %226 = arith.addf %224, %225 : vector<16x128xf32>
    %227 = arith.mulf %223, %226 : vector<16x128xf32>
    %228 = tpu.reciprocal %227 {approx = true} : vector<16x128xf32> -> vector<16x128xf32>
    %229 = arith.mulf %220, %228 : vector<16x128xf32>
    %230 = vector.shape_cast %229 : vector<16x128xf32> to vector<1x16x128xf32>
    %cst_120 = arith.constant dense<0.000000e+00> : vector<1xf32>
    %231 = vector.multi_reduction <add>, %230, %cst_120 [1, 2] : vector<1x16x128xf32> to vector<1xf32>
    %232 = vector.shape_cast %231 : vector<1xf32> to vector<1x1x1xf32>
    %233 = vector.extract %232[0, 0, 0] : f32 from vector<1x1x1xf32>
    %c8_121 = arith.constant 8 : index
    %234 = memref.load %arg19[%c8_121] : memref<9xf32, #tpu.memory_space<smem>>
    memref.store %233, %arg19[%c8_121] : memref<9xf32, #tpu.memory_space<smem>>
    return
  }
  func.func @transform_0(%arg0: i32) -> (i32, i32) {
    %c0_i32 = arith.constant 0 : i32
    %c0_i32_0 = arith.constant 0 : i32
    %c0_i32_1 = arith.constant 0 : i32
    return %c0_i32, %c0_i32_0 : i32, i32
  }
  func.func @transform_1(%arg0: i32) -> (i32, i32) {
    %c0_i32 = arith.constant 0 : i32
    %c0_i32_0 = arith.constant 0 : i32
    %c0_i32_1 = arith.constant 0 : i32
    return %c0_i32, %c0_i32_0 : i32, i32
  }
  func.func @transform_2(%arg0: i32) -> (i32, i32) {
    %c0_i32 = arith.constant 0 : i32
    %c0_i32_0 = arith.constant 0 : i32
    %c0_i32_1 = arith.constant 0 : i32
    return %c0_i32, %c0_i32_0 : i32, i32
  }
  func.func @transform_3(%arg0: i32) -> (i32, i32) {
    %c0_i32 = arith.constant 0 : i32
    %c0_i32_0 = arith.constant 0 : i32
    %c0_i32_1 = arith.constant 0 : i32
    return %c0_i32, %c0_i32_0 : i32, i32
  }
  func.func @transform_4(%arg0: i32) -> (i32, i32) {
    %c0_i32 = arith.constant 0 : i32
    %c0_i32_0 = arith.constant 0 : i32
    %c0_i32_1 = arith.constant 0 : i32
    return %c0_i32, %c0_i32_0 : i32, i32
  }
  func.func @transform_5(%arg0: i32) -> (i32, i32) {
    %c0_i32 = arith.constant 0 : i32
    %c0_i32_0 = arith.constant 0 : i32
    %c0_i32_1 = arith.constant 0 : i32
    return %c0_i32, %c0_i32_0 : i32, i32
  }
  func.func @transform_6(%arg0: i32) -> (i32, i32) {
    %c0_i32 = arith.constant 0 : i32
    %c0_i32_0 = arith.constant 0 : i32
    %c0_i32_1 = arith.constant 0 : i32
    return %c0_i32, %c0_i32_0 : i32, i32
  }
  func.func @transform_7(%arg0: i32) -> (i32, i32) {
    %c0_i32 = arith.constant 0 : i32
    %c0_i32_0 = arith.constant 0 : i32
    %c0_i32_1 = arith.constant 0 : i32
    return %c0_i32, %c0_i32_0 : i32, i32
  }
  func.func @transform_8(%arg0: i32) -> (i32, i32) {
    %c0_i32 = arith.constant 0 : i32
    %c0_i32_0 = arith.constant 0 : i32
    %c0_i32_1 = arith.constant 0 : i32
    return %c0_i32, %c0_i32_0 : i32, i32
  }
  func.func @transform_9(%arg0: i32) -> (i32, i32) {
    %c0_i32 = arith.constant 0 : i32
    %c0_i32_0 = arith.constant 0 : i32
    %c0_i32_1 = arith.constant 0 : i32
    return %c0_i32, %c0_i32_0 : i32, i32
  }
  func.func @transform_10(%arg0: i32) -> (i32, i32) {
    %c0_i32 = arith.constant 0 : i32
    %c0_i32_0 = arith.constant 0 : i32
    %c0_i32_1 = arith.constant 0 : i32
    return %c0_i32, %c0_i32_0 : i32, i32
  }
  func.func @transform_11(%arg0: i32) -> (i32, i32) {
    %c0_i32 = arith.constant 0 : i32
    %c0_i32_0 = arith.constant 0 : i32
    %c0_i32_1 = arith.constant 0 : i32
    return %c0_i32, %c0_i32_0 : i32, i32
  }
  func.func @transform_12(%arg0: i32) -> (i32, i32) {
    %c0_i32 = arith.constant 0 : i32
    %c0_i32_0 = arith.constant 0 : i32
    %c0_i32_1 = arith.constant 0 : i32
    return %c0_i32, %c0_i32_0 : i32, i32
  }
  func.func @transform_13(%arg0: i32) -> (i32, i32) {
    %c0_i32 = arith.constant 0 : i32
    %c0_i32_0 = arith.constant 0 : i32
    %c0_i32_1 = arith.constant 0 : i32
    return %c0_i32, %c0_i32_0 : i32, i32
  }
  func.func @transform_14(%arg0: i32) -> (i32, i32) {
    %c0_i32 = arith.constant 0 : i32
    %c0_i32_0 = arith.constant 0 : i32
    %c0_i32_1 = arith.constant 0 : i32
    return %c0_i32, %c0_i32_0 : i32, i32
  }
  func.func @transform_15(%arg0: i32) -> (i32, i32) {
    %c0_i32 = arith.constant 0 : i32
    %c0_i32_0 = arith.constant 0 : i32
    %c0_i32_1 = arith.constant 0 : i32
    return %c0_i32, %c0_i32_0 : i32, i32
  }
  func.func @transform_16(%arg0: i32) -> (i32, i32) {
    %c0_i32 = arith.constant 0 : i32
    %c0_i32_0 = arith.constant 0 : i32
    %c0_i32_1 = arith.constant 0 : i32
    return %c0_i32, %c0_i32_0 : i32, i32
  }
  func.func @transform_17(%arg0: i32) -> (i32, i32) {
    %c0_i32 = arith.constant 0 : i32
    %c0_i32_0 = arith.constant 0 : i32
    %c0_i32_1 = arith.constant 0 : i32
    return %c0_i32, %c0_i32_0 : i32, i32
  }
  func.func @transform_18(%arg0: i32) -> i32 {
    %c0_i32 = arith.constant 0 : i32
    %c0_i32_0 = arith.constant 0 : i32
    return %c0_i32 : i32
  }
}

</mosaic_0001>

<llo_original>
// kernel: enhance_loss.1
$region0: #{enhance_loss.1}
  #allocation0 [shape = 'u32[]', space=smem, size = 0x4, offset = 0x4, fixed_abs, tag = 'smem constant byte address 0x4 - core index']
  #allocation1 [shape = 'u32[72,128]{1,0:T(1,128)}', space=vmem, size = 0x9000, scoped, tag = 'internal scratch']
  #allocation2 [shape = 'f32[80,128]{1,0:T(8,128)}', space=vmem, size = 0xa000, scoped, tag = 'scratch operand']
  #allocation3 [shape = 'f32[40,64]{1,0:T(8,128)}', space=vmem, size = 0x5000, scoped, tag = 'scratch operand']
  #allocation4 [shape = 'f32[40,32]{1,0:T(8,128)}', space=vmem, size = 0x5000, scoped, tag = 'scratch operand']
  #allocation5 [shape = 'f32[80,128]{1,0:T(8,128)}', space=vmem, size = 0xa000, scoped, tag = 'scratch operand']
  %s0 = inlined_call_operand.vmem [shape: f32[4,32], index: 0, kind: input, shape index: {}]
  %s1 = inlined_call_operand.vmem [shape: f32[4,32], index: 1, kind: input, shape index: {}]
  %s2 = inlined_call_operand.vmem [shape: f32[16,128], index: 2, kind: input, shape index: {}]
  %s3 = inlined_call_operand.vmem [shape: f32[16,128], index: 3, kind: input, shape index: {}]
  %s4 = inlined_call_operand.vmem [shape: f32[8,64], index: 4, kind: input, shape index: {}]
  %s5 = inlined_call_operand.vmem [shape: f32[8,64], index: 5, kind: input, shape index: {}]
  %s6 = inlined_call_operand.vmem [shape: f32[4,32], index: 6, kind: input, shape index: {}]
  %s7 = inlined_call_operand.vmem [shape: f32[4,32], index: 7, kind: input, shape index: {}]
  %s8 = inlined_call_operand.vmem [shape: f32[16,128], index: 8, kind: input, shape index: {}]
  %s9 = inlined_call_operand.vmem [shape: f32[16,128], index: 9, kind: input, shape index: {}]
  %s10 = inlined_call_operand.vmem [shape: f32[80,80], index: 10, kind: input, shape index: {}, may-alias: {10,16}]
  %s11 = inlined_call_operand.vmem [shape: f32[128,128], index: 11, kind: input, shape index: {}, may-alias: {11,17}]
  %s12 = inlined_call_operand.vmem [shape: f32[40,40], index: 12, kind: input, shape index: {}]
  %s13 = inlined_call_operand.vmem [shape: f32[64,64], index: 13, kind: input, shape index: {}]
  %s14 = inlined_call_operand.vmem [shape: f32[40,40], index: 14, kind: input, shape index: {}]
  %s15 = inlined_call_operand.vmem [shape: f32[32,32], index: 15, kind: input, shape index: {}]
  %s16 = inlined_call_operand.vmem [shape: f32[80,80], index: 16, kind: input, shape index: {}, may-alias: {10,16}]
  %s17 = inlined_call_operand.vmem [shape: f32[128,128], index: 17, kind: input, shape index: {}, may-alias: {11,17}]
  %s18 = inlined_call_operand.vmem [shape: f32[9], index: 18, kind: output, shape index: {}]
  %s19 = sld [smem:[#allocation0]]
  $region82: #{enhance_loss.1} parent=0
    _
  %s21 = ssub.s32 1, %s19
  %s22 = scalar_select 0, %s21, %s19
  $region1: #{enhance_loss.1} parent=0
    #allocation6 [shape = 'u8[512]{0}', space=smem, size = 0x200, scoped, tag = 'output window, operand 0, single buffered']
    #allocation7 [shape = 's32[1]{0}', space=sflag, size = 0x4, scoped, tag = 'scoped memory for enhance_loss.1']
    %23 = vsyncpa [#allocation7], 0
    // Predicated region
    $region2: #{enhance_loss.1} parent=1 // pred_check
      _
    $region3: #{enhance_loss.1} parent=1 // pred_check_branch
      %25 = sbr.rel (0) target = $region5
    $region4: #{enhance_loss.1} parent=1 // pred_region
      _
    $region5: #{enhance_loss.1} parent=1 // pred_fallthru
      _
    // Predicated region
    $region6: #{enhance_loss.1} parent=1 // pred_check
      _
    $region7: #{enhance_loss.1} parent=1 // pred_check_branch
      %27 = sbr.rel (0) target = $region9
    $region8: #{enhance_loss.1} parent=1 // pred_region
      _
    $region9: #{enhance_loss.1} parent=1 // pred_fallthru
      _
    // Predicated region
    $region10: #{enhance_loss.1} parent=1 // pred_check
      _
    $region11: #{enhance_loss.1} parent=1 // pred_check_branch
      %29 = sbr.rel (0) target = $region13
    $region12: #{enhance_loss.1} parent=1 // pred_region
      _
    $region13: #{enhance_loss.1} parent=1 // pred_fallthru
      _
    // Predicated region
    $region14: #{enhance_loss.1} parent=1 // pred_check
      _
    $region15: #{enhance_loss.1} parent=1 // pred_check_branch
      %31 = sbr.rel (0) target = $region17
    $region16: #{enhance_loss.1} parent=1 // pred_region
      _
    $region17: #{enhance_loss.1} parent=1 // pred_fallthru
      _
    // Predicated region
    $region18: #{enhance_loss.1} parent=1 // pred_check
      _
    $region19: #{enhance_loss.1} parent=1 // pred_check_branch
      %33 = sbr.rel (0) target = $region21
    $region20: #{enhance_loss.1} parent=1 // pred_region
      _
    $region21: #{enhance_loss.1} parent=1 // pred_fallthru
      _
    // Predicated region
    $region22: #{enhance_loss.1} parent=1 // pred_check
      _
    $region23: #{enhance_loss.1} parent=1 // pred_check_branch
      %35 = sbr.rel (0) target = $region25
    $region24: #{enhance_loss.1} parent=1 // pred_region
      _
    $region25: #{enhance_loss.1} parent=1 // pred_fallthru
      _
    // Predicated region
    $region26: #{enhance_loss.1} parent=1 // pred_check
      _
    $region27: #{enhance_loss.1} parent=1 // pred_check_branch
      %37 = sbr.rel (0) target = $region29
    $region28: #{enhance_loss.1} parent=1 // pred_region
      _
    $region29: #{enhance_loss.1} parent=1 // pred_fallthru
      _
    // Predicated region
    $region30: #{enhance_loss.1} parent=1 // pred_check
      _
    $region31: #{enhance_loss.1} parent=1 // pred_check_branch
      %39 = sbr.rel (0) target = $region33
    $region32: #{enhance_loss.1} parent=1 // pred_region
      _
    $region33: #{enhance_loss.1} parent=1 // pred_fallthru
      _
    // Predicated region
    $region34: #{enhance_loss.1} parent=1 // pred_check
      _
    $region35: #{enhance_loss.1} parent=1 // pred_check_branch
      %41 = sbr.rel (0) target = $region37
    $region36: #{enhance_loss.1} parent=1 // pred_region
      _
    $region37: #{enhance_loss.1} parent=1 // pred_fallthru
      _
    // Predicated region
    $region38: #{enhance_loss.1} parent=1 // pred_check
      _
    $region39: #{enhance_loss.1} parent=1 // pred_check_branch
      %43 = sbr.rel (0) target = $region41
    $region40: #{enhance_loss.1} parent=1 // pred_region
      _
    $region41: #{enhance_loss.1} parent=1 // pred_fallthru
      _
    // Predicated region
    $region42: #{enhance_loss.1} parent=1 // pred_check
      _
    $region43: #{enhance_loss.1} parent=1 // pred_check_branch
      %45 = sbr.rel (0) target = $region45
    $region44: #{enhance_loss.1} parent=1 // pred_region
      _
    $region45: #{enhance_loss.1} parent=1 // pred_fallthru
      _
    // Predicated region
    $region46: #{enhance_loss.1} parent=1 // pred_check
      _
    $region47: #{enhance_loss.1} parent=1 // pred_check_branch
      %47 = sbr.rel (0) target = $region49
    $region48: #{enhance_loss.1} parent=1 // pred_region
      _
    $region49: #{enhance_loss.1} parent=1 // pred_fallthru
      _
    // Predicated region
    $region50: #{enhance_loss.1} parent=1 // pred_check
      _
    $region51: #{enhance_loss.1} parent=1 // pred_check_branch
      %49 = sbr.rel (0) target = $region53
    $region52: #{enhance_loss.1} parent=1 // pred_region
      _
    $region53: #{enhance_loss.1} parent=1 // pred_fallthru
      _
    // Predicated region
    $region54: #{enhance_loss.1} parent=1 // pred_check
      _
    $region55: #{enhance_loss.1} parent=1 // pred_check_branch
      %51 = sbr.rel (0) target = $region57
    $region56: #{enhance_loss.1} parent=1 // pred_region
      _
    $region57: #{enhance_loss.1} parent=1 // pred_fallthru
      _
    // Predicated region
    $region58: #{enhance_loss.1} parent=1 // pred_check
      _
    $region59: #{enhance_loss.1} parent=1 // pred_check_branch
      %53 = sbr.rel (0) target = $region61
    $region60: #{enhance_loss.1} parent=1 // pred_region
      _
    $region61: #{enhance_loss.1} parent=1 // pred_fallthru
      _
    // Predicated region
    $region62: #{enhance_loss.1} parent=1 // pred_check
      _
    $region63: #{enhance_loss.1} parent=1 // pred_check_branch
      %55 = sbr.rel (0) target = $region65
    $region64: #{enhance_loss.1} parent=1 // pred_region
      _
    $region65: #{enhance_loss.1} parent=1 // pred_fallthru
      _
    // Predicated region
    $region66: #{enhance_loss.1} parent=1 // pred_check
      _
    $region67: #{enhance_loss.1} parent=1 // pred_check_branch
      %57 = sbr.rel (0) target = $region69
    $region68: #{enhance_loss.1} parent=1 // pred_region
      _
    $region69: #{enhance_loss.1} parent=1 // pred_fallthru
      _
    // Predicated region
    $region70: #{enhance_loss.1} parent=1 // pred_check
      _
    $region71: #{enhance_loss.1} parent=1 // pred_check_branch
      %59 = sbr.rel (0) target = $region73
    $region72: #{enhance_loss.1} parent=1 // pred_region
      _
    $region73: #{enhance_loss.1} parent=1 // pred_fallthru
      _
    %v60 = vld [vmem:[%s0] sm:$0xf]
    %v61 = vld [vmem:[%s1] sm:$0xf]
    %v62 = vsub.f32 %v60, %v61
    %v63 = vmul.f32 %v62, %v62
    %vm64 = vcmask 257024
    %v65 = vsel %vm64, %v63, 0.0
    %66 = vadd.xlane.f32.xlu0 %v65
    %v67 = vpop.xlane.xlu0 %66
    %v68 = vrot.slane %v67, 4
    %v69 = vadd.f32 %v67, %v68
    %v70 = vrot.slane %v69, 2
    %v71 = vadd.f32 %v69, %v70
    %v72 = vrot.slane %v71, 1
    %v73 = vadd.f32 %v71, %v72
    %s74 = vtos %v73
    %s75 = scalar_lea.smem [#allocation6], 0
    %76 = sst [smem:[%s75]] %s74
    %v77 = vld [vmem:[%s2] sm:$0xff]
    %v78 = vld [vmem:[%s2 + $0x8] sm:$0xff]
    %v79 = vld [vmem:[%s3] sm:$0xff]
    %v80 = vld [vmem:[%s3 + $0x8] sm:$0xff]
    %v81 = vsub.f32 %v77, %v79
    %v82 = vsub.f32 %v78, %v80
    %v83 = vand.u32 2147483647, %v81
    %v84 = vand.u32 2147483647, %v82
    %v85 = vadd.f32 %v83, %v84
    %86 = vadd.xlane.f32.xlu0 %v85
    %v87 = vpop.xlane.xlu0 %86
    %v88 = vrot.slane %v87, 4
    %v89 = vadd.f32 %v87, %v88
    %v90 = vrot.slane %v89, 2
    %v91 = vadd.f32 %v89, %v90
    %v92 = vrot.slane %v91, 1
    %v93 = vadd.f32 %v91, %v92
    %s94 = vtos %v93
    %s95 = scalar_lea.smem [#allocation6], 1
    %96 = sst [smem:[%s95]] %s94
    %v97 = vld [vmem:[%s10] sm:$0xff]
    %v98 = vld [vmem:[%s10 + $0x8] sm:$0xff]
    %v99 = vld [vmem:[%s10 + $0x10] sm:$0xff]
    %v100 = vld [vmem:[%s10 + $0x18] sm:$0xff]
    %v101 = vld [vmem:[%s10 + $0x20] sm:$0xff]
    %v102 = vld [vmem:[%s10 + $0x28] sm:$0xff]
    %v103 = vld [vmem:[%s10 + $0x30] sm:$0xff]
    %v104 = vld [vmem:[%s10 + $0x38] sm:$0xff]
    %v105 = vld [vmem:[%s10 + $0x40] sm:$0xff]
    %v106 = vld [vmem:[%s10 + $0x48] sm:$0xff]
    %v107 = vld [vmem:[%s11] sm:$0xff]
    %v108 = vld [vmem:[%s11 + $0x8] sm:$0xff]
    %v109 = vld [vmem:[%s11 + $0x10] sm:$0xff]
    %v110 = vld [vmem:[%s11 + $0x18] sm:$0xff]
    %v111 = vld [vmem:[%s11 + $0x20] sm:$0xff]
    %v112 = vld [vmem:[%s11 + $0x28] sm:$0xff]
    %v113 = vld [vmem:[%s11 + $0x30] sm:$0xff]
    %v114 = vld [vmem:[%s11 + $0x38] sm:$0xff]
    %v115 = vld [vmem:[%s11 + $0x40] sm:$0xff]
    %v116 = vld [vmem:[%s11 + $0x48] sm:$0xff]
    %v117 = vld [vmem:[%s11 + $0x50] sm:$0xff]
    %v118 = vld [vmem:[%s11 + $0x58] sm:$0xff]
    %v119 = vld [vmem:[%s11 + $0x60] sm:$0xff]
    %v120 = vld [vmem:[%s11 + $0x68] sm:$0xff]
    %v121 = vld [vmem:[%s11 + $0x70] sm:$0xff]
    %v122 = vld [vmem:[%s11 + $0x78] sm:$0xff]
    %v123 = vmul.f32 %v77, %v77
    %v124 = vmul.f32 %v78, %v78
    %v125 = vmul.f32 %v79, %v79
    %v126 = vmul.f32 %v80, %v80
    %v127 = vmul.f32 %v77, %v79
    %v128 = vmul.f32 %v78, %v80
    %129 = vst [vmem:[#allocation2] sm:$0xff] %v77
    %130 = vst [vmem:[#allocation2 + $0x8] sm:$0xff] %v78
    %131 = vst [vmem:[#allocation2 + $0x10] sm:$0xff] %v79
    %132 = vst [vmem:[#allocation2 + $0x18] sm:$0xff] %v80
    %133 = vst [vmem:[#allocation2 + $0x20] sm:$0xff] %v123
    %134 = vst [vmem:[#allocation2 + $0x28] sm:$0xff] %v124
    %135 = vst [vmem:[#allocation2 + $0x30] sm:$0xff] %v125
    %136 = vst [vmem:[#allocation2 + $0x38] sm:$0xff] %v126
    %137 = vst [vmem:[#allocation2 + $0x40] sm:$0xff] %v127
    %138 = vst [vmem:[#allocation2 + $0x48] sm:$0xff] %v128
    %v139 = vld [vmem:[#allocation2] sm:$0xff]
    %v140 = vld [vmem:[#allocation2 + $0x8] sm:$0xff]
    %v141 = vld [vmem:[#allocation2 + $0x10] sm:$0xff]
    %v142 = vld [vmem:[#allocation2 + $0x18] sm:$0xff]
    %v143 = vld [vmem:[#allocation2 + $0x20] sm:$0xff]
    %v144 = vld [vmem:[#allocation2 + $0x28] sm:$0xff]
    %v145 = vld [vmem:[#allocation2 + $0x30] sm:$0xff]
    %v146 = vld [vmem:[#allocation2 + $0x38] sm:$0xff]
    %v147 = vld [vmem:[#allocation2 + $0x40] sm:$0xff]
    %v148 = vld [vmem:[#allocation2 + $0x48] sm:$0xff]
    %vm149 = vcmask 654336
    %v151 = vsel %vm149, %v97, 0
    %v154 = vsel %vm149, %v98, 0
    %v157 = vsel %vm149, %v99, 0
    %v160 = vsel %vm149, %v100, 0
    %v163 = vsel %vm149, %v101, 0
    %v166 = vsel %vm149, %v102, 0
    %v169 = vsel %vm149, %v103, 0
    %v172 = vsel %vm149, %v104, 0
    %v175 = vsel %vm149, %v105, 0
    %v178 = vsel %vm149, %v106, 0
    %180 = vmatpush.msra.mxu0 0.0
    %181 = vmatpush.msra.mxu0 0.0
    %182 = vmatpush.msra.mxu0 0.0
    %183 = vmatpush.msra.mxu0 0.0
    %184 = vmatpush.msra.mxu0 0.0
    %185 = vmatpush.msra.mxu0 0.0
    %186 = vmatpush.msra.mxu0 %v148
    %187 = vmatpush.msra.mxu0 %v147
    %188 = vmatpush.msra.mxu0 %v146
    %189 = vmatpush.msra.mxu0 %v145
    %190 = vmatpush.msra.mxu0 %v144
    %191 = vmatpush.msra.mxu0 %v143
    %192 = vmatpush.msra.mxu0 %v142
    %193 = vmatpush.msra.mxu0 %v141
    %194 = vmatpush.msra.mxu0 %v140
    %195 = vmatpush.msra.mxu0 %v139
    %196 = vmatmul.f32.gmra.mxu0 %v151
    %v197 = vpop.f32.mrf.mxu0
    %v198 = vadd.f32 0.0, %v197
    %199 = vmatmul.f32.gmra.mxu0 %v154
    %v200 = vpop.f32.mrf.mxu0
    %v201 = vadd.f32 0.0, %v200
    %202 = vmatmul.f32.gmra.mxu0 %v157
    %v203 = vpop.f32.mrf.mxu0
    %v204 = vadd.f32 0.0, %v203
    %205 = vmatmul.f32.gmra.mxu0 %v160
    %v206 = vpop.f32.mrf.mxu0
    %v207 = vadd.f32 0.0, %v206
    %208 = vmatmul.f32.gmra.mxu0 %v163
    %v209 = vpop.f32.mrf.mxu0
    %v210 = vadd.f32 0.0, %v209
    %211 = vmatmul.f32.gmra.mxu0 %v166
    %v212 = vpop.f32.mrf.mxu0
    %v213 = vadd.f32 0.0, %v212
    %214 = vmatmul.f32.gmra.mxu0 %v169
    %v215 = vpop.f32.mrf.mxu0
    %v216 = vadd.f32 0.0, %v215
    %217 = vmatmul.f32.gmra.mxu0 %v172
    %v218 = vpop.f32.mrf.mxu0
    %v219 = vadd.f32 0.0, %v218
    %220 = vmatmul.f32.gmra.mxu0 %v175
    %v221 = vpop.f32.mrf.mxu0
    %v222 = vadd.f32 0.0, %v221
    %223 = vmatmul.f32.gmra.mxu0 %v178
    %v224 = vpop.f32.mrf.mxu0
    %v225 = vadd.f32 0.0, %v224
    %226 = vdwg.mxu0
    %227 = vmatpush.msra.mxu0 %v122
    %228 = vmatpush.msra.mxu0 %v121
    %229 = vmatpush.msra.mxu0 %v120
    %230 = vmatpush.msra.mxu0 %v119
    %231 = vmatpush.msra.mxu0 %v118
    %232 = vmatpush.msra.mxu0 %v117
    %233 = vmatpush.msra.mxu0 %v116
    %234 = vmatpush.msra.mxu0 %v115
    %235 = vmatpush.msra.mxu0 %v114
    %236 = vmatpush.msra.mxu0 %v113
    %237 = vmatpush.msra.mxu0 %v112
    %238 = vmatpush.msra.mxu0 %v111
    %239 = vmatpush.msra.mxu0 %v110
    %240 = vmatpush.msra.mxu0 %v109
    %241 = vmatpush.msra.mxu0 %v108
    %242 = vmatpush.msra.mxu0 %v107
    %243 = vmatmul.f32.gmra.mxu0 %v198
    %v244 = vpop.f32.mrf.mxu0
    %v245 = vadd.f32 0.0, %v244
    %246 = vmatmul.f32.gmra.mxu0 %v201
    %v247 = vpop.f32.mrf.mxu0
    %v248 = vadd.f32 0.0, %v247
    %249 = vmatmul.f32.gmra.mxu0 %v204
    %v250 = vpop.f32.mrf.mxu0
    %v251 = vadd.f32 0.0, %v250
    %252 = vmatmul.f32.gmra.mxu0 %v207
    %v253 = vpop.f32.mrf.mxu0
    %v254 = vadd.f32 0.0, %v253
    %255 = vmatmul.f32.gmra.mxu0 %v210
    %v256 = vpop.f32.mrf.mxu0
    %v257 = vadd.f32 0.0, %v256
    %258 = vmatmul.f32.gmra.mxu0 %v213
    %v259 = vpop.f32.mrf.mxu0
    %v260 = vadd.f32 0.0, %v259
    %261 = vmatmul.f32.gmra.mxu0 %v216
    %v262 = vpop.f32.mrf.mxu0
    %v263 = vadd.f32 0.0, %v262
    %264 = vmatmul.f32.gmra.mxu0 %v219
    %v265 = vpop.f32.mrf.mxu0
    %v266 = vadd.f32 0.0, %v265
    %267 = vmatmul.f32.gmra.mxu0 %v222
    %v268 = vpop.f32.mrf.mxu0
    %v269 = vadd.f32 0.0, %v268
    %270 = vmatmul.f32.gmra.mxu0 %v225
    %v271 = vpop.f32.mrf.mxu0
    %v272 = vadd.f32 0.0, %v271
    %273 = vdwg.mxu0
    %v274 = vmul.f32 %v245, %v245
    %v275 = vmul.f32 %v248, %v248
    %v276 = vmul.f32 %v251, %v251
    %v277 = vmul.f32 %v254, %v254
    %v278 = vmul.f32 %v245, %v251
    %v279 = vmul.f32 %v248, %v254
    %v280 = vsub.f32 %v257, %v274
    %v281 = vsub.f32 %v260, %v275
    %v282 = vsub.f32 %v263, %v276
    %v283 = vsub.f32 %v266, %v277
    %v284 = vsub.f32 %v269, %v278
    %v285 = vsub.f32 %v272, %v279
    %v286 = vmul.f32 %v278, 2.0
    %v287 = vmul.f32 %v279, 2.0
    %v288 = vadd.f32 %v286, 0.0001
    %v289 = vadd.f32 %v287, 0.0001
    %v290 = vmul.f32 %v284, 2.0
    %v291 = vmul.f32 %v285, 2.0
    %v292 = vadd.f32 %v290, 0.0009
    %v293 = vadd.f32 %v291, 0.0009
    %v294 = vmul.f32 %v288, %v292
    %v295 = vmul.f32 %v289, %v293
    %v296 = vadd.f32 %v274, %v276
    %v297 = vadd.f32 %v275, %v277
    %v298 = vadd.f32 %v296, 0.0001
    %v299 = vadd.f32 %v297, 0.0001
    %v300 = vadd.f32 %v280, %v282
    %v301 = vadd.f32 %v281, %v283
    %v302 = vadd.f32 %v300, 0.0009
    %v303 = vadd.f32 %v301, 0.0009
    %v304 = vmul.f32 %v298, %v302
    %v305 = vmul.f32 %v299, %v303
    %v306 = vrcp.pop %v304
    %v307 = vrcp.pop %v305
    %v308 = vmul.f32 %v294, %v306
    %v309 = vmul.f32 %v295, %v307
    %v310 = vadd.f32 %v308, %v309
    %311 = vadd.xlane.f32.xlu0 %v310
    %v312 = vpop.xlane.xlu0 %311
    %v313 = vrot.slane %v312, 4
    %v314 = vadd.f32 %v312, %v313
    %v315 = vrot.slane %v314, 2
    %v316 = vadd.f32 %v314, %v315
    %v317 = vrot.slane %v316, 1
    %v318 = vadd.f32 %v316, %v317
    %s319 = vtos %v318
    %s320 = scalar_lea.smem [#allocation6], 2
    %321 = sst [smem:[%s320]] %s319
    %v322 = vld [vmem:[%s4] sm:$0xff]
    %v323 = vld [vmem:[%s5] sm:$0xff]
    %v324 = vsub.f32 %v322, %v323
    %v325 = vand.u32 2147483647, %v324
    %vm326 = vcmask 523264
    %v327 = vsel %vm326, %v325, 0.0
    %328 = vadd.xlane.f32.xlu0 %v327
    %v329 = vpop.xlane.xlu0 %328
    %v330 = vrot.slane %v329, 4
    %v331 = vadd.f32 %v329, %v330
    %v332 = vrot.slane %v331, 2
    %v333 = vadd.f32 %v331, %v332
    %v334 = vrot.slane %v333, 1
    %v335 = vadd.f32 %v333, %v334
    %s336 = vtos %v335
    %s337 = scalar_lea.smem [#allocation6], 3
    %338 = sst [smem:[%s337]] %s336
    %v339 = vld [vmem:[%s12] sm:$0xff]
    %v340 = vld [vmem:[%s12 + $0x8] sm:$0xff]
    %v341 = vld [vmem:[%s12 + $0x10] sm:$0xff]
    %v342 = vld [vmem:[%s12 + $0x18] sm:$0xff]
    %v343 = vld [vmem:[%s12 + $0x20] sm:$0xff]
    %v344 = vld [vmem:[%s13] sm:$0xff]
    %v345 = vld [vmem:[%s13 + $0x8] sm:$0xff]
    %v346 = vld [vmem:[%s13 + $0x10] sm:$0xff]
    %v347 = vld [vmem:[%s13 + $0x18] sm:$0xff]
    %v348 = vld [vmem:[%s13 + $0x20] sm:$0xff]
    %v349 = vld [vmem:[%s13 + $0x28] sm:$0xff]
    %v350 = vld [vmem:[%s13 + $0x30] sm:$0xff]
    %v351 = vld [vmem:[%s13 + $0x38] sm:$0xff]
    %v352 = vmul.f32 %v322, %v322
    %v353 = vmul.f32 %v323, %v323
    %v354 = vmul.f32 %v322, %v323
    %355 = vst.msk [vmem:[#allocation3] sm:$0xff] %vm326, %v322
    %356 = vst.msk [vmem:[#allocation3 + $0x8] sm:$0xff] %vm326, %v323
    %357 = vst.msk [vmem:[#allocation3 + $0x10] sm:$0xff] %vm326, %v352
    %358 = vst.msk [vmem:[#allocation3 + $0x18] sm:$0xff] %vm326, %v353
    %359 = vst.msk [vmem:[#allocation3 + $0x20] sm:$0xff] %vm326, %v354
    %v360 = vld [vmem:[#allocation3] sm:$0xff]
    %v361 = vld [vmem:[#allocation3 + $0x8] sm:$0xff]
    %v362 = vld [vmem:[#allocation3 + $0x10] sm:$0xff]
    %v363 = vld [vmem:[#allocation3 + $0x18] sm:$0xff]
    %v364 = vld [vmem:[#allocation3 + $0x20] sm:$0xff]
    %vm365 = vcmask 326656
    %v367 = vsel %vm365, %v339, 0
    %v370 = vsel %vm365, %v340, 0
    %v373 = vsel %vm365, %v341, 0
    %v376 = vsel %vm365, %v342, 0
    %v379 = vsel %vm365, %v343, 0
    %381 = vmatpush.msra.mxu0 0.0
    %382 = vmatpush.msra.mxu0 0.0
    %383 = vmatpush.msra.mxu0 0.0
    %384 = vmatpush.msra.mxu0 0.0
    %385 = vmatpush.msra.mxu0 0.0
    %386 = vmatpush.msra.mxu0 0.0
    %387 = vmatpush.msra.mxu0 0.0
    %388 = vmatpush.msra.mxu0 0.0
    %389 = vmatpush.msra.mxu0 0.0
    %390 = vmatpush.msra.mxu0 0.0
    %391 = vmatpush.msra.mxu0 0.0
    %392 = vmatpush.msra.mxu0 %v364
    %393 = vmatpush.msra.mxu0 %v363
    %394 = vmatpush.msra.mxu0 %v362
    %395 = vmatpush.msra.mxu0 %v361
    %396 = vmatpush.msra.mxu0 %v360
    %397 = vmatmul.f32.gmra.mxu0 %v367
    %v398 = vpop.f32.mrf.mxu0
    %v399 = vadd.f32 0.0, %v398
    %400 = vmatmul.f32.gmra.mxu0 %v370
    %v401 = vpop.f32.mrf.mxu0
    %v402 = vadd.f32 0.0, %v401
    %403 = vmatmul.f32.gmra.mxu0 %v373
    %v404 = vpop.f32.mrf.mxu0
    %v405 = vadd.f32 0.0, %v404
    %406 = vmatmul.f32.gmra.mxu0 %v376
    %v407 = vpop.f32.mrf.mxu0
    %v408 = vadd.f32 0.0, %v407
    %409 = vmatmul.f32.gmra.mxu0 %v379
    %v410 = vpop.f32.mrf.mxu0
    %v411 = vadd.f32 0.0, %v410
    %412 = vdwg.mxu0
    %v414 = vsel %vm326, %v399, 0
    %v417 = vsel %vm326, %v402, 0
    %v420 = vsel %vm326, %v405, 0
    %v423 = vsel %vm326, %v408, 0
    %v426 = vsel %vm326, %v411, 0
    %428 = vmatpush.msra.mxu0 0.0
    %429 = vmatpush.msra.mxu0 0.0
    %430 = vmatpush.msra.mxu0 0.0
    %431 = vmatpush.msra.mxu0 0.0
    %432 = vmatpush.msra.mxu0 0.0
    %433 = vmatpush.msra.mxu0 0.0
    %434 = vmatpush.msra.mxu0 0.0
    %435 = vmatpush.msra.mxu0 0.0
    %436 = vmatpush.msra.mxu0 %v351
    %437 = vmatpush.msra.mxu0 %v350
    %438 = vmatpush.msra.mxu0 %v349
    %439 = vmatpush.msra.mxu0 %v348
    %440 = vmatpush.msra.mxu0 %v347
    %441 = vmatpush.msra.mxu0 %v346
    %442 = vmatpush.msra.mxu0 %v345
    %443 = vmatpush.msra.mxu0 %v344
    %444 = vmatmul.f32.gmra.mxu0 %v414
    %v445 = vpop.f32.mrf.mxu0
    %v446 = vadd.f32 0.0, %v445
    %447 = vmatmul.f32.gmra.mxu0 %v417
    %v448 = vpop.f32.mrf.mxu0
    %v449 = vadd.f32 0.0, %v448
    %450 = vmatmul.f32.gmra.mxu0 %v420
    %v451 = vpop.f32.mrf.mxu0
    %v452 = vadd.f32 0.0, %v451
    %453 = vmatmul.f32.gmra.mxu0 %v423
    %v454 = vpop.f32.mrf.mxu0
    %v455 = vadd.f32 0.0, %v454
    %456 = vmatmul.f32.gmra.mxu0 %v426
    %v457 = vpop.f32.mrf.mxu0
    %v458 = vadd.f32 0.0, %v457
    %459 = vdwg.mxu0
    %v460 = vmul.f32 %v446, %v446
    %v461 = vmul.f32 %v449, %v449
    %v462 = vmul.f32 %v446, %v449
    %v463 = vsub.f32 %v452, %v460
    %v464 = vsub.f32 %v455, %v461
    %v465 = vsub.f32 %v458, %v462
    %v466 = vmul.f32 %v462, 2.0
    %v467 = vadd.f32 %v466, 0.0001
    %v468 = vmul.f32 %v465, 2.0
    %v469 = vadd.f32 %v468, 0.0009
    %v470 = vmul.f32 %v467, %v469
    %v471 = vadd.f32 %v460, %v461
    %v472 = vadd.f32 %v471, 0.0001
    %v473 = vadd.f32 %v463, %v464
    %v474 = vadd.f32 %v473, 0.0009
    %v475 = vmul.f32 %v472, %v474
    %v476 = vrcp.pop %v475
    %v477 = vmul.f32 %v470, %v476
    %v478 = vsel %vm326, %v477, 0.0
    %479 = vadd.xlane.f32.xlu0 %v478
    %v480 = vpop.xlane.xlu0 %479
    %v481 = vrot.slane %v480, 4
    %v482 = vadd.f32 %v480, %v481
    %v483 = vrot.slane %v482, 2
    %v484 = vadd.f32 %v482, %v483
    %v485 = vrot.slane %v484, 1
    %v486 = vadd.f32 %v484, %v485
    %s487 = vtos %v486
    %s488 = scalar_lea.smem [#allocation6], 4
    %489 = sst [smem:[%s488]] %s487
    %v490 = vld [vmem:[%s6] sm:$0xf]
    %v491 = vld [vmem:[%s7] sm:$0xf]
    %v492 = vsub.f32 %v490, %v491
    %v493 = vand.u32 2147483647, %v492
    %v494 = vsel %vm64, %v493, 0.0
    %495 = vadd.xlane.f32.xlu0 %v494
    %v496 = vpop.xlane.xlu0 %495
    %v497 = vrot.slane %v496, 4
    %v498 = vadd.f32 %v496, %v497
    %v499 = vrot.slane %v498, 2
    %v500 = vadd.f32 %v498, %v499
    %v501 = vrot.slane %v500, 1
    %v502 = vadd.f32 %v500, %v501
    %s503 = vtos %v502
    %s504 = scalar_lea.smem [#allocation6], 5
    %505 = sst [smem:[%s504]] %s503
    %v506 = vld [vmem:[%s14] sm:$0xff]
    %v507 = vld [vmem:[%s14 + $0x8] sm:$0xff]
    %v508 = vld [vmem:[%s14 + $0x10] sm:$0xff]
    %v509 = vld [vmem:[%s14 + $0x18] sm:$0xff]
    %v510 = vld [vmem:[%s14 + $0x20] sm:$0xff]
    %v511 = vld [vmem:[%s15] sm:$0xff]
    %v512 = vld [vmem:[%s15 + $0x8] sm:$0xff]
    %v513 = vld [vmem:[%s15 + $0x10] sm:$0xff]
    %v514 = vld [vmem:[%s15 + $0x18] sm:$0xff]
    %vm515 = vcmask 261120
    %516 = vst.msk [vmem:[#allocation4] sm:$0xff] %vm515, 0.0
    %517 = vst.msk [vmem:[#allocation4 + $0x8] sm:$0xff] %vm515, 0.0
    %518 = vst.msk [vmem:[#allocation4 + $0x10] sm:$0xff] %vm515, 0.0
    %519 = vst.msk [vmem:[#allocation4 + $0x18] sm:$0xff] %vm515, 0.0
    %520 = vst.msk [vmem:[#allocation4 + $0x20] sm:$0xff] %vm515, 0.0
    %v521 = vmul.f32 %v490, %v490
    %v522 = vmul.f32 %v491, %v491
    %v523 = vmul.f32 %v490, %v491
    %524 = vst.msk [vmem:[#allocation4] sm:$0xf] %vm64, %v490
    %525 = vst.msk [vmem:[#allocation4 + $0x8] sm:$0xf] %vm64, %v491
    %526 = vst.msk [vmem:[#allocation4 + $0x10] sm:$0xf] %vm64, %v521
    %527 = vst.msk [vmem:[#allocation4 + $0x18] sm:$0xf] %vm64, %v522
    %528 = vst.msk [vmem:[#allocation4 + $0x20] sm:$0xf] %vm64, %v523
    %v529 = vld [vmem:[#allocation4] sm:$0xff]
    %v530 = vld [vmem:[#allocation4 + $0x8] sm:$0xff]
    %v531 = vld [vmem:[#allocation4 + $0x10] sm:$0xff]
    %v532 = vld [vmem:[#allocation4 + $0x18] sm:$0xff]
    %v533 = vld [vmem:[#allocation4 + $0x20] sm:$0xff]
    %v535 = vsel %vm365, %v506, 0
    %v538 = vsel %vm365, %v507, 0
    %v541 = vsel %vm365, %v508, 0
    %v544 = vsel %vm365, %v509, 0
    %v547 = vsel %vm365, %v510, 0
    %549 = vmatpush.msra.mxu0 0.0
    %550 = vmatpush.msra.mxu0 0.0
    %551 = vmatpush.msra.mxu0 0.0
    %552 = vmatpush.msra.mxu0 0.0
    %553 = vmatpush.msra.mxu0 0.0
    %554 = vmatpush.msra.mxu0 0.0
    %555 = vmatpush.msra.mxu0 0.0
    %556 = vmatpush.msra.mxu0 0.0
    %557 = vmatpush.msra.mxu0 0.0
    %558 = vmatpush.msra.mxu0 0.0
    %559 = vmatpush.msra.mxu0 0.0
    %560 = vmatpush.msra.mxu0 %v533
    %561 = vmatpush.msra.mxu0 %v532
    %562 = vmatpush.msra.mxu0 %v531
    %563 = vmatpush.msra.mxu0 %v530
    %564 = vmatpush.msra.mxu0 %v529
    %565 = vmatmul.f32.gmra.mxu0 %v535
    %v566 = vpop.f32.mrf.mxu0
    %v567 = vadd.f32 0.0, %v566
    %568 = vmatmul.f32.gmra.mxu0 %v538
    %v569 = vpop.f32.mrf.mxu0
    %v570 = vadd.f32 0.0, %v569
    %571 = vmatmul.f32.gmra.mxu0 %v541
    %v572 = vpop.f32.mrf.mxu0
    %v573 = vadd.f32 0.0, %v572
    %574 = vmatmul.f32.gmra.mxu0 %v544
    %v575 = vpop.f32.mrf.mxu0
    %v576 = vadd.f32 0.0, %v575
    %577 = vmatmul.f32.gmra.mxu0 %v547
    %v578 = vpop.f32.mrf.mxu0
    %v579 = vadd.f32 0.0, %v578
    %580 = vdwg.mxu0
    %v582 = vsel %vm515, %v567, 0
    %v585 = vsel %vm515, %v570, 0
    %v588 = vsel %vm515, %v573, 0
    %v591 = vsel %vm515, %v576, 0
    %v594 = vsel %vm515, %v579, 0
    %596 = vmatpush.msra.mxu0 0.0
    %597 = vmatpush.msra.mxu0 0.0
    %598 = vmatpush.msra.mxu0 0.0
    %599 = vmatpush.msra.mxu0 0.0
    %600 = vmatpush.msra.mxu0 0.0
    %601 = vmatpush.msra.mxu0 0.0
    %602 = vmatpush.msra.mxu0 0.0
    %603 = vmatpush.msra.mxu0 0.0
    %604 = vmatpush.msra.mxu0 0.0
    %605 = vmatpush.msra.mxu0 0.0
    %606 = vmatpush.msra.mxu0 0.0
    %607 = vmatpush.msra.mxu0 0.0
    %608 = vmatpush.msra.mxu0 %v514
    %609 = vmatpush.msra.mxu0 %v513
    %610 = vmatpush.msra.mxu0 %v512
    %611 = vmatpush.msra.mxu0 %v511
    %612 = vmatmul.f32.gmra.mxu0 %v582
    %v613 = vpop.f32.mrf.mxu0
    %v614 = vadd.f32 0.0, %v613
    %615 = vmatmul.f32.gmra.mxu0 %v585
    %v616 = vpop.f32.mrf.mxu0
    %v617 = vadd.f32 0.0, %v616
    %618 = vmatmul.f32.gmra.mxu0 %v588
    %v619 = vpop.f32.mrf.mxu0
    %v620 = vadd.f32 0.0, %v619
    %621 = vmatmul.f32.gmra.mxu0 %v591
    %v622 = vpop.f32.mrf.mxu0
    %v623 = vadd.f32 0.0, %v622
    %624 = vmatmul.f32.gmra.mxu0 %v594
    %v625 = vpop.f32.mrf.mxu0
    %v626 = vadd.f32 0.0, %v625
    %627 = vdwg.mxu0
    %v628 = vmul.f32 %v614, %v614
    %v629 = vmul.f32 %v617, %v617
    %v630 = vmul.f32 %v614, %v617
    %v631 = vsub.f32 %v620, %v628
    %v632 = vsub.f32 %v623, %v629
    %v633 = vsub.f32 %v626, %v630
    %v634 = vmul.f32 %v630, 2.0
    %v635 = vadd.f32 %v634, 0.0001
    %v636 = vmul.f32 %v633, 2.0
    %v637 = vadd.f32 %v636, 0.0009
    %v638 = vmul.f32 %v635, %v637
    %v639 = vadd.f32 %v628, %v629
    %v640 = vadd.f32 %v639, 0.0001
    %v641 = vadd.f32 %v631, %v632
    %v642 = vadd.f32 %v641, 0.0009
    %v643 = vmul.f32 %v640, %v642
    %v644 = vrcp.pop %v643
    %v645 = vmul.f32 %v638, %v644
    %v646 = vsel %vm64, %v645, 0.0
    %647 = vadd.xlane.f32.xlu0 %v646
    %v648 = vpop.xlane.xlu0 %647
    %v649 = vrot.slane %v648, 4
    %v650 = vadd.f32 %v648, %v649
    %v651 = vrot.slane %v650, 2
    %v652 = vadd.f32 %v650, %v651
    %v653 = vrot.slane %v652, 1
    %v654 = vadd.f32 %v652, %v653
    %s655 = vtos %v654
    %s656 = scalar_lea.smem [#allocation6], 6
    %657 = sst [smem:[%s656]] %s655
    %v658 = vld [vmem:[%s8] sm:$0xff]
    %v659 = vld [vmem:[%s8 + $0x8] sm:$0xff]
    %v660 = vld [vmem:[%s9] sm:$0xff]
    %v661 = vld [vmem:[%s9 + $0x8] sm:$0xff]
    %v662 = vsub.f32 %v658, %v660
    %v663 = vsub.f32 %v659, %v661
    %v664 = vmul.f32 %v662, %v662
    %v665 = vmul.f32 %v663, %v663
    %v666 = vadd.f32 %v664, %v665
    %667 = vadd.xlane.f32.xlu0 %v666
    %v668 = vpop.xlane.xlu0 %667
    %v669 = vrot.slane %v668, 4
    %v670 = vadd.f32 %v668, %v669
    %v671 = vrot.slane %v670, 2
    %v672 = vadd.f32 %v670, %v671
    %v673 = vrot.slane %v672, 1
    %v674 = vadd.f32 %v672, %v673
    %s675 = vtos %v674
    %s676 = scalar_lea.smem [#allocation6], 7
    %677 = sst [smem:[%s676]] %s675
    %v678 = vld [vmem:[%s16] sm:$0xff]
    %v679 = vld [vmem:[%s16 + $0x8] sm:$0xff]
    %v680 = vld [vmem:[%s16 + $0x10] sm:$0xff]
    %v681 = vld [vmem:[%s16 + $0x18] sm:$0xff]
    %v682 = vld [vmem:[%s16 + $0x20] sm:$0xff]
    %v683 = vld [vmem:[%s16 + $0x28] sm:$0xff]
    %v684 = vld [vmem:[%s16 + $0x30] sm:$0xff]
    %v685 = vld [vmem:[%s16 + $0x38] sm:$0xff]
    %v686 = vld [vmem:[%s16 + $0x40] sm:$0xff]
    %v687 = vld [vmem:[%s16 + $0x48] sm:$0xff]
    %v688 = vld [vmem:[%s17] sm:$0xff]
    %v689 = vld [vmem:[%s17 + $0x8] sm:$0xff]
    %v690 = vld [vmem:[%s17 + $0x10] sm:$0xff]
    %v691 = vld [vmem:[%s17 + $0x18] sm:$0xff]
    %v692 = vld [vmem:[%s17 + $0x20] sm:$0xff]
    %v693 = vld [vmem:[%s17 + $0x28] sm:$0xff]
    %v694 = vld [vmem:[%s17 + $0x30] sm:$0xff]
    %v695 = vld [vmem:[%s17 + $0x38] sm:$0xff]
    %v696 = vld [vmem:[%s17 + $0x40] sm:$0xff]
    %v697 = vld [vmem:[%s17 + $0x48] sm:$0xff]
    %v698 = vld [vmem:[%s17 + $0x50] sm:$0xff]
    %v699 = vld [vmem:[%s17 + $0x58] sm:$0xff]
    %v700 = vld [vmem:[%s17 + $0x60] sm:$0xff]
    %v701 = vld [vmem:[%s17 + $0x68] sm:$0xff]
    %v702 = vld [vmem:[%s17 + $0x70] sm:$0xff]
    %v703 = vld [vmem:[%s17 + $0x78] sm:$0xff]
    %v704 = vmul.f32 %v658, %v658
    %v705 = vmul.f32 %v659, %v659
    %v706 = vmul.f32 %v660, %v660
    %v707 = vmul.f32 %v661, %v661
    %v708 = vmul.f32 %v658, %v660
    %v709 = vmul.f32 %v659, %v661
    %710 = vst [vmem:[#allocation5] sm:$0xff] %v658
    %711 = vst [vmem:[#allocation5 + $0x8] sm:$0xff] %v659
    %712 = vst [vmem:[#allocation5 + $0x10] sm:$0xff] %v660
    %713 = vst [vmem:[#allocation5 + $0x18] sm:$0xff] %v661
    %714 = vst [vmem:[#allocation5 + $0x20] sm:$0xff] %v704
    %715 = vst [vmem:[#allocation5 + $0x28] sm:$0xff] %v705
    %716 = vst [vmem:[#allocation5 + $0x30] sm:$0xff] %v706
    %717 = vst [vmem:[#allocation5 + $0x38] sm:$0xff] %v707
    %718 = vst [vmem:[#allocation5 + $0x40] sm:$0xff] %v708
    %719 = vst [vmem:[#allocation5 + $0x48] sm:$0xff] %v709
    %v720 = vld [vmem:[#allocation5] sm:$0xff]
    %v721 = vld [vmem:[#allocation5 + $0x8] sm:$0xff]
    %v722 = vld [vmem:[#allocation5 + $0x10] sm:$0xff]
    %v723 = vld [vmem:[#allocation5 + $0x18] sm:$0xff]
    %v724 = vld [vmem:[#allocation5 + $0x20] sm:$0xff]
    %v725 = vld [vmem:[#allocation5 + $0x28] sm:$0xff]
    %v726 = vld [vmem:[#allocation5 + $0x30] sm:$0xff]
    %v727 = vld [vmem:[#allocation5 + $0x38] sm:$0xff]
    %v728 = vld [vmem:[#allocation5 + $0x40] sm:$0xff]
    %v729 = vld [vmem:[#allocation5 + $0x48] sm:$0xff]
    %v731 = vsel %vm149, %v678, 0
    %v734 = vsel %vm149, %v679, 0
    %v737 = vsel %vm149, %v680, 0
    %v740 = vsel %vm149, %v681, 0
    %v743 = vsel %vm149, %v682, 0
    %v746 = vsel %vm149, %v683, 0
    %v749 = vsel %vm149, %v684, 0
    %v752 = vsel %vm149, %v685, 0
    %v755 = vsel %vm149, %v686, 0
    %v758 = vsel %vm149, %v687, 0
    %760 = vmatpush.msra.mxu0 0.0
    %761 = vmatpush.msra.mxu0 0.0
    %762 = vmatpush.msra.mxu0 0.0
    %763 = vmatpush.msra.mxu0 0.0
    %764 = vmatpush.msra.mxu0 0.0
    %765 = vmatpush.msra.mxu0 0.0
    %766 = vmatpush.msra.mxu0 %v729
    %767 = vmatpush.msra.mxu0 %v728
    %768 = vmatpush.msra.mxu0 %v727
    %769 = vmatpush.msra.mxu0 %v726
    %770 = vmatpush.msra.mxu0 %v725
    %771 = vmatpush.msra.mxu0 %v724
    %772 = vmatpush.msra.mxu0 %v723
    %773 = vmatpush.msra.mxu0 %v722
    %774 = vmatpush.msra.mxu0 %v721
    %775 = vmatpush.msra.mxu0 %v720
    %776 = vmatmul.f32.gmra.mxu0 %v731
    %v777 = vpop.f32.mrf.mxu0
    %v778 = vadd.f32 0.0, %v777
    %779 = vmatmul.f32.gmra.mxu0 %v734
    %v780 = vpop.f32.mrf.mxu0
    %v781 = vadd.f32 0.0, %v780
    %782 = vmatmul.f32.gmra.mxu0 %v737
    %v783 = vpop.f32.mrf.mxu0
    %v784 = vadd.f32 0.0, %v783
    %785 = vmatmul.f32.gmra.mxu0 %v740
    %v786 = vpop.f32.mrf.mxu0
    %v787 = vadd.f32 0.0, %v786
    %788 = vmatmul.f32.gmra.mxu0 %v743
    %v789 = vpop.f32.mrf.mxu0
    %v790 = vadd.f32 0.0, %v789
    %791 = vmatmul.f32.gmra.mxu0 %v746
    %v792 = vpop.f32.mrf.mxu0
    %v793 = vadd.f32 0.0, %v792
    %794 = vmatmul.f32.gmra.mxu0 %v749
    %v795 = vpop.f32.mrf.mxu0
    %v796 = vadd.f32 0.0, %v795
    %797 = vmatmul.f32.gmra.mxu0 %v752
    %v798 = vpop.f32.mrf.mxu0
    %v799 = vadd.f32 0.0, %v798
    %800 = vmatmul.f32.gmra.mxu0 %v755
    %v801 = vpop.f32.mrf.mxu0
    %v802 = vadd.f32 0.0, %v801
    %803 = vmatmul.f32.gmra.mxu0 %v758
    %v804 = vpop.f32.mrf.mxu0
    %v805 = vadd.f32 0.0, %v804
    %806 = vdwg.mxu0
    %807 = vmatpush.msra.mxu0 %v703
    %808 = vmatpush.msra.mxu0 %v702
    %809 = vmatpush.msra.mxu0 %v701
    %810 = vmatpush.msra.mxu0 %v700
    %811 = vmatpush.msra.mxu0 %v699
    %812 = vmatpush.msra.mxu0 %v698
    %813 = vmatpush.msra.mxu0 %v697
    %814 = vmatpush.msra.mxu0 %v696
    %815 = vmatpush.msra.mxu0 %v695
    %816 = vmatpush.msra.mxu0 %v694
    %817 = vmatpush.msra.mxu0 %v693
    %818 = vmatpush.msra.mxu0 %v692
    %819 = vmatpush.msra.mxu0 %v691
    %820 = vmatpush.msra.mxu0 %v690
    %821 = vmatpush.msra.mxu0 %v689
    %822 = vmatpush.msra.mxu0 %v688
    %823 = vmatmul.f32.gmra.mxu0 %v778
    %v824 = vpop.f32.mrf.mxu0
    %v825 = vadd.f32 0.0, %v824
    %826 = vmatmul.f32.gmra.mxu0 %v781
    %v827 = vpop.f32.mrf.mxu0
    %v828 = vadd.f32 0.0, %v827
    %829 = vmatmul.f32.gmra.mxu0 %v784
    %v830 = vpop.f32.mrf.mxu0
    %v831 = vadd.f32 0.0, %v830
    %832 = vmatmul.f32.gmra.mxu0 %v787
    %v833 = vpop.f32.mrf.mxu0
    %v834 = vadd.f32 0.0, %v833
    %835 = vmatmul.f32.gmra.mxu0 %v790
    %v836 = vpop.f32.mrf.mxu0
    %v837 = vadd.f32 0.0, %v836
    %838 = vmatmul.f32.gmra.mxu0 %v793
    %v839 = vpop.f32.mrf.mxu0
    %v840 = vadd.f32 0.0, %v839
    %841 = vmatmul.f32.gmra.mxu0 %v796
    %v842 = vpop.f32.mrf.mxu0
    %v843 = vadd.f32 0.0, %v842
    %844 = vmatmul.f32.gmra.mxu0 %v799
    %v845 = vpop.f32.mrf.mxu0
    %v846 = vadd.f32 0.0, %v845
    %847 = vmatmul.f32.gmra.mxu0 %v802
    %v848 = vpop.f32.mrf.mxu0
    %v849 = vadd.f32 0.0, %v848
    %850 = vmatmul.f32.gmra.mxu0 %v805
    %v851 = vpop.f32.mrf.mxu0
    %v852 = vadd.f32 0.0, %v851
    %853 = vdwg.mxu0
    %v854 = vmul.f32 %v825, %v825
    %v855 = vmul.f32 %v828, %v828
    %v856 = vmul.f32 %v831, %v831
    %v857 = vmul.f32 %v834, %v834
    %v858 = vmul.f32 %v825, %v831
    %v859 = vmul.f32 %v828, %v834
    %v860 = vsub.f32 %v837, %v854
    %v861 = vsub.f32 %v840, %v855
    %v862 = vsub.f32 %v843, %v856
    %v863 = vsub.f32 %v846, %v857
    %v864 = vsub.f32 %v849, %v858
    %v865 = vsub.f32 %v852, %v859
    %v866 = vmul.f32 %v858, 2.0
    %v867 = vmul.f32 %v859, 2.0
    %v868 = vadd.f32 %v866, 0.0001
    %v869 = vadd.f32 %v867, 0.0001
    %v870 = vmul.f32 %v864, 2.0
    %v871 = vmul.f32 %v865, 2.0
    %v872 = vadd.f32 %v870, 0.0009
    %v873 = vadd.f32 %v871, 0.0009
    %v874 = vmul.f32 %v868, %v872
    %v875 = vmul.f32 %v869, %v873
    %v876 = vadd.f32 %v854, %v856
    %v877 = vadd.f32 %v855, %v857
    %v878 = vadd.f32 %v876, 0.0001
    %v879 = vadd.f32 %v877, 0.0001
    %v880 = vadd.f32 %v860, %v862
    %v881 = vadd.f32 %v861, %v863
    %v882 = vadd.f32 %v880, 0.0009
    %v883 = vadd.f32 %v881, 0.0009
    %v884 = vmul.f32 %v878, %v882
    %v885 = vmul.f32 %v879, %v883
    %v886 = vrcp.pop %v884
    %v887 = vrcp.pop %v885
    %v888 = vmul.f32 %v874, %v886
    %v889 = vmul.f32 %v875, %v887
    %v890 = vadd.f32 %v888, %v889
    %891 = vadd.xlane.f32.xlu0 %v890
    %v892 = vpop.xlane.xlu0 %891
    %v893 = vrot.slane %v892, 4
    %v894 = vadd.f32 %v892, %v893
    %v895 = vrot.slane %v894, 2
    %v896 = vadd.f32 %v894, %v895
    %v897 = vrot.slane %v896, 1
    %v898 = vadd.f32 %v896, %v897
    %s899 = vtos %v898
    %s900 = scalar_lea.smem [#allocation6], 8
    %901 = sst [smem:[%s900]] %s899
    // Predicated region
    $region74: #{enhance_loss.1} parent=1 // pred_check
      _
    $region75: #{enhance_loss.1} parent=1 // pred_check_branch
      %903 = sbr.rel (0) target = $region77
    $region76: #{enhance_loss.1} parent=1 // pred_region
      %905 = vsyncadd [#allocation7], 0
      %s907 = sshll.u32 %s18, 4
      %s908 = int_to_ptr.vmem [resolvable:$true] %s907
      %910 = dma.smem_to_vmem [#allocation6], 16, %s908, [#allocation7]
    $region77: #{enhance_loss.1} parent=1 // pred_fallthru
      _
    // Predicated region
    $region78: #{enhance_loss.1} parent=1 // pred_check
      _
    $region79: #{enhance_loss.1} parent=1 // pred_check_branch
      %912 = sbr.rel (0) target = $region81
    $region80: #{enhance_loss.1} parent=1 // pred_region
      %914 = dma.done [#allocation7], 16
    $region81: #{enhance_loss.1} parent=1 // pred_fallthru
      _
    %915 = sfence
    %916 = vsyncpa [#allocation7], 1

</llo_original>
